<compile_context>
chip_gen: v7x
topology: tpu7x:2x2x1
jax: 0.10.0
libtpu: 0.0.40
codegen_flags: <defaults>
</compile_context>

<pallas_src>
import jax
import jax.numpy as jnp
from jax.experimental import pallas as pl
from jax.experimental.pallas import tpu as pltpu


def _round_up(v, m):
    return (v + m - 1) // m * m


def _device_budgets():
    """Per-generation weight-block budget and scoped-VMEM limit."""
    try:
        vmem_cap = int(pltpu.get_tpu_info().vmem_capacity_bytes)
    except Exception:
        vmem_cap = 64 * 1024 * 1024  # conservative (v7x-sized) fallback
    if vmem_cap <= 64 * 1024 * 1024:
        # v7x: 64 MiB VMEM per TensorCore, 2 TCs -> keep blocks modest.
        weight_block_bytes = 8 * 1024 * 1024
    else:
        # v5e / v6e: 128 MiB VMEM -> bigger blocks cut grid steps.
        weight_block_bytes = 16 * 1024 * 1024
    # Raise the scoped-VMEM limit (v5e defaults to only 16 MiB) with headroom.
    vmem_limit_bytes = min(vmem_cap * 3 // 4, 100 * 1024 * 1024)
    return weight_block_bytes, vmem_limit_bytes


def _select_tiles(K_pad, N_pad, itemsize, weight_block_bytes):
    """Balanced K/N tiling of the (K_pad, N_pad) weight under a VMEM budget."""
    lane = 128
    # Largest K block such that a 128-lane-wide weight column fits the budget.
    tk_cap = max(lane, (weight_block_bytes // (lane * itemsize)) // lane * lane)
    n_k = pl.cdiv(K_pad, min(K_pad, tk_cap))
    tk = _round_up(pl.cdiv(K_pad, n_k), lane)
    n_k = pl.cdiv(K_pad, tk)

    # Widest N block such that a (tk, tn) weight block fits the budget.
    tn_cap = max(lane, (weight_block_bytes // (tk * itemsize)) // lane * lane)
    n_n = pl.cdiv(N_pad, min(N_pad, tn_cap))
    if N_pad >= 2 * lane:
        # Give v7x's two TensorCores at least two parallel N blocks; make the
        # count even when it costs at most one extra lane tile of padding.
        n_n = max(n_n, 2)
        if n_n % 2:
            extra = _round_up(pl.cdiv(N_pad, n_n + 1), lane) * (n_n + 1) - N_pad
            if extra <= lane:
                n_n += 1
    tn = _round_up(pl.cdiv(N_pad, n_n), lane)
    n_n = pl.cdiv(N_pad, tn)
    return tk, n_k, tn, n_n


def _linear_kernel(x_ref, w_ref, b_ref, o_ref):
    # grid = (n_n, k): the reduction axis k is INNERMOST and the output
    # index_map ignores k, so o_ref stays resident across k steps.  Accumulating
    # directly into o_ref is correct ONLY under this ordering -- do not reorder
    # the grid or mark k "parallel".
    k = pl.program_id(1)

    # (M, tk) @ (tk, tn) -> (M, tn) on the MXU, f32 accumulation.
    partial = jnp.dot(x_ref[...], w_ref[...], preferred_element_type=jnp.float32)

    @pl.when(k == 0)
    def _():
        # Fuse the bias add into the first K step (init + bias in one write).
        o_ref[...] = partial + b_ref[...]

    @pl.when(k != 0)
    def _():
        o_ref[...] += partial


def prepare_linear_classifier_head(
    weight,
    bias,
    *,
    compute_dtype=jnp.bfloat16,
    weight_block_bytes=None,
):
    """One-time preparation of the frozen classifier head (call once, reuse).

    Casts the (N, K) weight to compute_dtype, zero-pads K (required: garbage in
    padded K columns would corrupt real outputs) and N (only feeds discarded
    output columns), and transposes to a lane-dense (K_pad, N_pad) layout so the
    kernel runs a plain (M,K)@(K,N) contraction with no per-block transpose.
    """
    N, K = weight.shape
    assert bias.shape == (N,)
    itemsize = jnp.dtype(compute_dtype).itemsize

    default_wbb, vmem_limit_bytes = _device_budgets()
    if weight_block_bytes is None:
        weight_block_bytes = default_wbb

    K_pad = _round_up(K, 128)
    N_pad = _round_up(N, 128)
    tk, n_k, tn, n_n = _select_tiles(K_pad, N_pad, itemsize, weight_block_bytes)
    K_pad, N_pad = n_k * tk, n_n * tn

    w_prepared = jnp.pad(
        weight.astype(compute_dtype), ((0, N_pad - N), (0, K_pad - K))
    ).T  # (K_pad, N_pad), zero-padded, compute dtype
    b_prepared = jnp.pad(
        bias.astype(jnp.float32).reshape(1, N), ((0, 0), (0, N_pad - N))
    )

    return dict(
        w=w_prepared,
        b=b_prepared,
        N=N,
        K=K,
        K_pad=K_pad,
        N_pad=N_pad,
        tk=tk,
        tn=tn,
        n_k=n_k,
        n_n=n_n,
        compute_dtype=compute_dtype,
        vmem_limit_bytes=vmem_limit_bytes,
    )


def linear_classifier_forward(x, head):
    """x: (B, ...) -> (B, num_labels) float32, matching nn.Linear on x.view(B, -1)."""
    B = x.shape[0]
    x2d = x.reshape(B, -1)  # torch .view(B, -1)
    M, K = x2d.shape
    assert K == head["K"], "flattened input dim must match prepared weight"

    compute_dtype = head["compute_dtype"]
    itemsize = jnp.dtype(compute_dtype).itemsize
    K_pad, N_pad = head["K_pad"], head["N_pad"]
    tk, tn, n_k, n_n = head["tk"], head["tn"], head["n_k"], head["n_n"]

    # bf16 packs two rows per sublane -> pad M to 16 so the LHS tile is fully
    # packed (8 is enough for 4-byte dtypes).
    m_align = 16 if itemsize == 2 else 8
    M_pad = _round_up(M, m_align)

    x_c = x2d.astype(compute_dtype)
    if (M_pad, K_pad) != (M, K):
        x_c = jnp.pad(x_c, ((0, M_pad - M), (0, K_pad - K)))

    # Triple-buffer the weight stream when the grid has >= 3 steps and the
    # budget allows: compute is ~0 per step, so this hides DMA issue latency.
    n_steps = n_n * n_k
    w_spec_kwargs = {}
    if n_steps >= 3 and 3 * tk * tn * itemsize <= head["vmem_limit_bytes"] // 2:
        w_spec_kwargs["pipeline_mode"] = pl.Buffered(3)

    cost = pl.CostEstimate(
        flops=2 * M_pad * N_pad * K_pad,
        bytes_accessed=(
            M_pad * K_pad * itemsize      # activations
            + K_pad * N_pad * itemsize    # weight stream (dominant)
            + N_pad * 4                   # bias
            + M_pad * N_pad * 4           # output
        ),
        transcendentals=0,
    )

    out = pl.pallas_call(
        _linear_kernel,
        out_shape=jax.ShapeDtypeStruct((M_pad, N_pad), jnp.float32),
        grid_spec=pltpu.PrefetchScalarGridSpec(
            num_scalar_prefetch=0,
            grid=(n_n, n_k),  # reduction axis (k) last
            in_specs=[
                pl.BlockSpec((M_pad, tk), lambda j, k: (0, k)),                 # x
                pl.BlockSpec((tk, tn), lambda j, k: (k, j), **w_spec_kwargs),   # W (K, N)
                pl.BlockSpec((1, tn), lambda j, k: (0, j)),                     # bias
            ],
            out_specs=pl.BlockSpec((M_pad, tn), lambda j, k: (0, j)),
        ),
        compiler_params=pltpu.CompilerParams(
            dimension_semantics=("parallel", "arbitrary"),
            vmem_limit_bytes=head["vmem_limit_bytes"],
        ),
        cost_estimate=cost,
    )(x_c, head["w"], head["b"])

    return out[:M, : head["N"]]


if __name__ == "__main__":
    key = jax.random.PRNGKey(0)
    kx, kw = jax.random.split(key)

    # Frozen-feature shapes: batch=2, (C=4, H=16, W=16) -> dim=1024, and the
    # real nn.Linear default num_labels=1000 (exercises the N-padding path).
    B, C, H, W = 2, 4, 16, 16
    dim = C * H * W
    num_labels = 1000

    x = jax.random.normal(kx, (B, C, H, W), dtype=jnp.float32)

    # Deterministic init matching the module: weight ~ N(0, 0.01), bias = 0.
    weight = 0.01 * jax.random.normal(kw, (num_labels, dim), dtype=jnp.float32)
    bias = jnp.zeros((num_labels,), dtype=jnp.float32)

    # Reference in plain f32 JAX; the kernel streams bf16 weights/activations
    # with f32 accumulation, so compare with a bf16-appropriate tolerance.
    ref = x.reshape(B, -1) @ weight.T + bias

    # One-time prep of the frozen head (cached and reused across calls).
    head = prepare_linear_classifier_head(weight, bias)
    out = jax.block_until_ready(linear_classifier_forward(x, head))
    assert out.shape == (B, num_labels)
    assert jnp.allclose(out, ref, atol=3e-2, rtol=3e-2), float(
        jnp.max(jnp.abs(out - ref))
    )

    # Also exercise the multi-block K accumulation + Buffered(3) weight-stream
    # path by forcing small weight blocks on the same problem.
    head_small = prepare_linear_classifier_head(
        weight, bias, weight_block_bytes=128 * 1024
    )
    out2 = jax.block_until_ready(linear_classifier_forward(x, head_small))
    assert jnp.allclose(out2, ref, atol=3e-2, rtol=3e-2), float(
        jnp.max(jnp.abs(out2 - ref))
    )

    print("KERNEL_OK")
</pallas_src>

<mosaic_0001>
module attributes {stable_mosaic.version = 11 : i64} {
  func.func @_linear_kernel(%arg0: i32, %arg1: i32, %arg2: memref<16x1024xbf16, #tpu.memory_space<vmem>>, %arg3: memref<1024x512xbf16, #tpu.memory_space<vmem>>, %arg4: memref<1x512xf32, #tpu.memory_space<vmem>>, %arg5: memref<16x512xf32, #tpu.memory_space<vmem>>) attributes {dimension_semantics = [#tpu.dimension_semantics<parallel>, #tpu.dimension_semantics<arbitrary>], iteration_bounds = array<i64: 2, 1>, scalar_prefetch = 0 : i64, scratch_operands = 0 : i64, tpu.core_type = #tpu.core_type<tc>, window_params = [{transform_indices = @transform_0, window_bounds = array<i64: 16, 1024>}, {transform_indices = @transform_1, window_bounds = array<i64: 1024, 512>}, {transform_indices = @transform_2, window_bounds = array<i64: 1, 512>}, {transform_indices = @transform_3, window_bounds = array<i64: 16, 512>}]} {
    %c0 = arith.constant 0 : index
    %c0_0 = arith.constant 0 : index
    %0 = vector.load %arg2[%c0, %c0_0] : memref<16x1024xbf16, #tpu.memory_space<vmem>>, vector<16x1024xbf16>
    %c0_1 = arith.constant 0 : index
    %c0_2 = arith.constant 0 : index
    %1 = vector.load %arg3[%c0_1, %c0_2] : memref<1024x512xbf16, #tpu.memory_space<vmem>>, vector<1024x512xbf16>
    %cst = arith.constant dense<0.000000e+00> : vector<16x512xf32>
    %2 = tpu.matmul %0, %1, %cst {dimension_numbers = #tpu.dot_dimension_numbers<[1], [0], [0], [1], [0, 0, 1, 1], [], []>} : vector<16x1024xbf16>, vector<1024x512xbf16>, vector<16x512xf32> -> vector<16x512xf32>
    %c0_i32 = arith.constant 0 : i32
    %3 = arith.cmpi eq, %arg1, %c0_i32 : i32
    %4 = arith.extui %3 : i1 to i32
    %c0_i32_3 = arith.constant 0 : i32
    %5 = arith.cmpi ne, %4, %c0_i32_3 : i32
    scf.if %5 {
      %c0_6 = arith.constant 0 : index
      %c0_7 = arith.constant 0 : index
      %9 = vector.load %arg4[%c0_6, %c0_7] : memref<1x512xf32, #tpu.memory_space<vmem>>, vector<1x512xf32>
      %10 = vector.broadcast %9 : vector<1x512xf32> to vector<16x512xf32>
      %11 = arith.addf %2, %10 : vector<16x512xf32>
      %c0_8 = arith.constant 0 : index
      %c0_9 = arith.constant 0 : index
      %12 = vector.load %arg5[%c0_8, %c0_9] : memref<16x512xf32, #tpu.memory_space<vmem>>, vector<16x512xf32>
      tpu.vector_store %arg5[%c0_8, %c0_9], %11 {strides = array<i32>} : memref<16x512xf32, #tpu.memory_space<vmem>>, vector<16x512xf32>,
    } else {
    }
    %c0_i32_4 = arith.constant 0 : i32
    %6 = arith.cmpi ne, %arg1, %c0_i32_4 : i32
    %7 = arith.extui %6 : i1 to i32
    %c0_i32_5 = arith.constant 0 : i32
    %8 = arith.cmpi ne, %7, %c0_i32_5 : i32
    scf.if %8 {
      %c0_6 = arith.constant 0 : index
      %c0_7 = arith.constant 0 : index
      %9 = vector.load %arg5[%c0_6, %c0_7] : memref<16x512xf32, #tpu.memory_space<vmem>>, vector<16x512xf32>
      %10 = arith.addf %9, %2 : vector<16x512xf32>
      %c0_8 = arith.constant 0 : index
      %c0_9 = arith.constant 0 : index
      %11 = vector.load %arg5[%c0_8, %c0_9] : memref<16x512xf32, #tpu.memory_space<vmem>>, vector<16x512xf32>
      tpu.vector_store %arg5[%c0_8, %c0_9], %10 {strides = array<i32>} : memref<16x512xf32, #tpu.memory_space<vmem>>, vector<16x512xf32>,
    } else {
    }
    return
  }
  func.func @transform_0(%arg0: i32, %arg1: i32) -> (i32, i32) {
    %c0_i32 = arith.constant 0 : i32
    %c0_i32_0 = arith.constant 0 : i32
    return %c0_i32, %arg1 : i32, i32
  }
  func.func @transform_1(%arg0: i32, %arg1: i32) -> (i32, i32) {
    %c0_i32 = arith.constant 0 : i32
    return %arg1, %arg0 : i32, i32
  }
  func.func @transform_2(%arg0: i32, %arg1: i32) -> (i32, i32) {
    %c0_i32 = arith.constant 0 : i32
    %c0_i32_0 = arith.constant 0 : i32
    return %c0_i32, %arg0 : i32, i32
  }
  func.func @transform_3(%arg0: i32, %arg1: i32) -> (i32, i32) {
    %c0_i32 = arith.constant 0 : i32
    %c0_i32_0 = arith.constant 0 : i32
    return %c0_i32, %arg0 : i32, i32
  }
}

</mosaic_0001>

<llo_original>
// kernel: tpu_custom_call.1
$region0: #{tpu_custom_call.1}
  #allocation0 [shape = 'u32[]', space=smem, size = 0x4, offset = 0x4, fixed_abs, tag = 'smem constant byte address 0x4 - core index']
  #allocation1 [shape = 'u32[144,128]{1,0:T(1,128)}', space=vmem, size = 0x12000, scoped, tag = 'internal scratch']
  %s0 = inlined_call_operand.hbm [shape: bf16[16,1024], index: 0, kind: input, shape index: {}]
  %s1 = inlined_call_operand.hbm [shape: bf16[1024,1024], index: 1, kind: input, shape index: {}]
  %s2 = inlined_call_operand.hbm [shape: f32[1,1024], index: 2, kind: input, shape index: {}]
  %s3 = inlined_call_operand.hbm [shape: f32[16,1024], index: 3, kind: output, shape index: {}]
  %s4 = sld [smem:[#allocation0]]
  $region65: #{tpu_custom_call.1} parent=0
    _
  %s6 = ssub.s32 1, %s4
  %s7 = scalar_select 0, %s6, %s4
  $region1: #{tpu_custom_call.1} parent=0
    #allocation2 [shape = 'u8[32768]{0}', space=vmem, size = 0x8000, scoped, tag = 'input window, operand 0, single buffered']
    #allocation3 [shape = 's32[2]{0}', space=sflag, size = 0x8, scoped, tag = 'scoped memory for tpu_custom_call.1']
    #allocation4 [shape = 's32[2]{0}', space=sflag, size = 0x8, scoped, tag = 'scoped memory for tpu_custom_call.1']
    #allocation5 [shape = 'u8[2097152]{0}', space=vmem, size = 0x200000, scoped, tag = 'input window, operand 1']
    #allocation6 [shape = 's32[2]{0}', space=sflag, size = 0x8, scoped, tag = 'scoped memory for tpu_custom_call.1']
    #allocation7 [shape = 'u8[4096]{0}', space=vmem, size = 0x1000, scoped, tag = 'input window, operand 2']
    #allocation8 [shape = 'u8[65536]{0}', space=vmem, size = 0x10000, scoped, tag = 'output window, operand 0']
    %8 = vsyncpa [#allocation3], 0
    %9 = vsyncpa [#allocation6], 0
    %s10 = scalar_lea.sflag [#allocation6], 1
    %11 = vsyncpa %s10, 0
    %12 = vsyncpa [#allocation4], 0
    %s13 = scalar_lea.sflag [#allocation4], 1
    %14 = vsyncpa %s13, 0
    loop: start=0, step=1, limit=4
    $region2: #{tpu_custom_call.1} parent=1 // loop_pre_header
      _
    $region3: #{tpu_custom_call.1} parent=1 // loop_header
      %s16 = sphi 0, %s20
      %p17 = scmp.ge.s32.totalorder %s16, 4
      %s23 = sphi 0, %s35
      %s24 = sphi 0, %s31
      %s25 = sphi 0, %s23
      %s26 = sphi 0, %s24
      %s27 = sphi 0, %s25
      %s28 = sphi 0, %s26
      %s38 = sphi 0, %s40
      %s41 = sphi 0, %s38
      %s42 = sphi 0, %s41
      %s58 = sphi 0, %s42
      %s66 = sphi 0, %s68
      %s69 = sphi 0, %s66
      %s70 = sphi 0, %s69
      %s86 = sphi 0, %s70
      %s92 = sphi 0, %s94
      %s95 = sphi 0, %s92
      %s96 = sphi 0, %s95
      %s112 = sphi 0, %s96
      %s118 = sphi 0, %s120
      %s121 = sphi 0, %s118
      %s122 = sphi 0, %s121
      %s138 = sphi 0, %s122
    $region4: #{tpu_custom_call.1} parent=1 // loop_header_branch
      %19 = sbr.rel (%p17) target = $region8
    $region5: #{tpu_custom_call.1} parent=1 // loop_body
      %s21 = ssub.s32 %s16, 1
      %s22 = ssub.s32 %s16, 2
      %s29 = sadd.s32 1, %s24
      %p30 = scmp.ge.s32.totalorder %s29, 1
      %s31 = scalar_select %p30, 0, %s29
      %s32 = sadd.s32 1, %s23
      %s33 = scalar_select %p30, %s32, %s23
      %p34 = scmp.ge.s32.totalorder %s33, 2
      %s35 = scalar_select %p34, 0, %s33
      %s36 = ssub.s32 %s24, %s31
      %p37 = scmp.eq.s32.totalorder %s36, 0
      %s39 = sadd.s32 %s38, 1
      %s40 = scalar_select %p37, %s38, %s39
      %p43 = pneg %p37
      %p44 = scmp.eq.s32.totalorder %s16, 1
      %p45 = por %p43, %p44
      %p46 = scmp.ne.s32.totalorder %s38, %s41
      %p47 = scmp.eq.s32.totalorder %s16, 0
      %p48 = por %p46, %p47
      %p49 = scmp.ne.s32.totalorder %s38, %s41
      %p50 = scmp.eq.s32.totalorder %s21, 1
      %p51 = por %p49, %p50
      %p52 = scmp.ne.s32.totalorder %s41, %s42
      %p53 = scmp.eq.s32.totalorder %s21, 0
      %p54 = por %p52, %p53
      %p55 = scmp.ne.s32.totalorder %s41, %s42
      %p56 = scmp.eq.s32.totalorder %s22, 1
      %p57 = por %p55, %p56
      %p59 = scmp.ne.s32.totalorder %s42, %s58
      %p60 = scmp.eq.s32.totalorder %s22, 0
      %p61 = por %p59, %p60
      %s62 = ssub.s32 %s24, %s31
      %s63 = ssub.s32 %s23, %s35
      %s64 = sor.u32 %s62, %s63
      %p65 = scmp.eq.s32.totalorder %s64, 0
      %s67 = sadd.s32 %s66, 1
      %s68 = scalar_select %p65, %s66, %s67
      %p71 = pneg %p65
      %p72 = scmp.eq.s32.totalorder %s16, 1
      %p73 = por %p71, %p72
      %p74 = scmp.ne.s32.totalorder %s66, %s69
      %p75 = scmp.eq.s32.totalorder %s16, 0
      %p76 = por %p74, %p75
      %p77 = scmp.ne.s32.totalorder %s66, %s69
      %p78 = scmp.eq.s32.totalorder %s21, 1
      %p79 = por %p77, %p78
      %p80 = scmp.ne.s32.totalorder %s69, %s70
      %p81 = scmp.eq.s32.totalorder %s21, 0
      %p82 = por %p80, %p81
      %p83 = scmp.ne.s32.totalorder %s69, %s70
      %p84 = scmp.eq.s32.totalorder %s22, 1
      %p85 = por %p83, %p84
      %p87 = scmp.ne.s32.totalorder %s70, %s86
      %p88 = scmp.eq.s32.totalorder %s22, 0
      %p89 = por %p87, %p88
      %s90 = ssub.s32 %s23, %s35
      %p91 = scmp.eq.s32.totalorder %s90, 0
      %s93 = sadd.s32 %s92, 1
      %s94 = scalar_select %p91, %s92, %s93
      %p97 = pneg %p91
      %p98 = scmp.eq.s32.totalorder %s16, 1
      %p99 = por %p97, %p98
      %p100 = scmp.ne.s32.totalorder %s92, %s95
      %p101 = scmp.eq.s32.totalorder %s16, 0
      %p102 = por %p100, %p101
      %p103 = scmp.ne.s32.totalorder %s92, %s95
      %p104 = scmp.eq.s32.totalorder %s21, 1
      %p105 = por %p103, %p104
      %p106 = scmp.ne.s32.totalorder %s95, %s96
      %p107 = scmp.eq.s32.totalorder %s21, 0
      %p108 = por %p106, %p107
      %p109 = scmp.ne.s32.totalorder %s95, %s96
      %p110 = scmp.eq.s32.totalorder %s22, 1
      %p111 = por %p109, %p110
      %p113 = scmp.ne.s32.totalorder %s96, %s112
      %p114 = scmp.eq.s32.totalorder %s22, 0
      %p115 = por %p113, %p114
      %s116 = ssub.s32 %s23, %s35
      %p117 = scmp.eq.s32.totalorder %s116, 0
      %s119 = sadd.s32 %s118, 1
      %s120 = scalar_select %p117, %s118, %s119
      %p123 = pneg %p117
      %p124 = scmp.eq.s32.totalorder %s16, 1
      %p125 = por %p123, %p124
      %p126 = scmp.ne.s32.totalorder %s118, %s121
      %p127 = scmp.eq.s32.totalorder %s16, 0
      %p128 = por %p126, %p127
      %p129 = scmp.ne.s32.totalorder %s118, %s121
      %p130 = scmp.eq.s32.totalorder %s21, 1
      %p131 = por %p129, %p130
      %p132 = scmp.ne.s32.totalorder %s121, %s122
      %p133 = scmp.eq.s32.totalorder %s21, 0
      %p134 = por %p132, %p133
      %p135 = scmp.ne.s32.totalorder %s121, %s122
      %p136 = scmp.eq.s32.totalorder %s22, 1
      %p137 = por %p135, %p136
      %p139 = scmp.ne.s32.totalorder %s122, %s138
      %p140 = scmp.eq.s32.totalorder %s22, 0
      %p141 = por %p139, %p140
      %p142 = scmp.le.s32.totalorder 1, %s16
      %p143 = scmp.lt.s32.totalorder %s16, 3
      %p144 = pnand %p142, %p143
      %p145 = pneg %p144
      // Predicated region
      $region9: #{tpu_custom_call.1} parent=5 // pred_check
        _
      $region10: #{tpu_custom_call.1} parent=5 // pred_check_branch
        %147 = sbr.rel (%p144) target = $region12
      $region11: #{tpu_custom_call.1} parent=5 // pred_region
        %s148 = ssub.s32 %s16, 1
        // Predicated region
        $region13: #{tpu_custom_call.1} parent=11 // pred_check
          %p149 = pneg %p54
        $region14: #{tpu_custom_call.1} parent=11 // pred_check_branch
          %151 = sbr.rel (%p149) target = $region16
        $region15: #{tpu_custom_call.1} parent=11 // pred_region
          %s152 = smul.u32 8, %s26
          %s154 = ssub.s32 1024, 1024
          %155 = vsyncadd [#allocation3], %s154
          %s156 = smul.addr %s152, 64
          %s157 = scalar_lea.hbm %s0, %s156
          %s158 = sshll.u32 [#allocation2], 4
          %s159 = int_to_ptr.vmem [resolvable:$true] %s158
          %164 = dma.hbm_to_vmem [thread:$0]  %s157, 1024, %s159, [#allocation3], 512, 512, 32
        $region16: #{tpu_custom_call.1} parent=11 // pred_fallthru
          _
      $region12: #{tpu_custom_call.1} parent=5 // pred_fallthru
        _
      %p165 = scmp.lt.s32.totalorder %s16, 2
      // Predicated region
      $region17: #{tpu_custom_call.1} parent=5 // pred_check
        %p166 = pneg %p165
      $region18: #{tpu_custom_call.1} parent=5 // pred_check_branch
        %168 = sbr.rel (%p166) target = $region20
      $region19: #{tpu_custom_call.1} parent=5 // pred_region
        // Predicated region
        $region21: #{tpu_custom_call.1} parent=19 // pred_check
          %p169 = pneg %p76
        $region22: #{tpu_custom_call.1} parent=19 // pred_check_branch
          %171 = sbr.rel (%p169) target = $region24
        $region23: #{tpu_custom_call.1} parent=19 // pred_region
          %s172 = sand.u32 %s16, 1
          %s173 = scalar_lea.sflag [#allocation6], %s172
          %s174 = sand.u32 %s66, 1
          %s175 = smul.addr %s174, 2048
          %s176 = scalar_lea.vmem [#allocation5], %s175
          %s177 = smul.u32 128, %s24
          %s178 = smul.u32 4, %s23
          %s180 = ssub.s32 32768, 32768
          %181 = vsyncadd %s173, %s180
          %s182 = smul.addr %s177, 8
          %s183 = sadd.s32 %s178, %s182
          %s184 = smul.addr %s183, 64
          %s185 = scalar_lea.hbm %s1, %s184
          %s186 = sshll.u32 %s176, 4
          %s187 = int_to_ptr.vmem [resolvable:$true] %s186
          %192 = dma.hbm_to_vmem [thread:$0]  %s185, 32768, %s187, %s173, 512, 256, 16
        $region24: #{tpu_custom_call.1} parent=19 // pred_fallthru
          _
        // Predicated region
        $region25: #{tpu_custom_call.1} parent=19 // pred_check
          %p193 = pneg %p102
        $region26: #{tpu_custom_call.1} parent=19 // pred_check_branch
          %195 = sbr.rel (%p193) target = $region28
        $region27: #{tpu_custom_call.1} parent=19 // pred_region
          %s196 = sand.u32 %s16, 1
          %s197 = scalar_lea.sflag [#allocation6], %s196
          %s198 = sand.u32 %s92, 1
          %s199 = smul.addr %s198, 4
          %s200 = scalar_lea.vmem [#allocation7], %s199
          %s201 = smul.u32 4, %s23
          %s203 = ssub.s32 64, 64
          %204 = vsyncadd %s197, %s203
          %s205 = smul.addr %s201, 16
          %s206 = scalar_lea.hbm %s2, %s205
          %s208 = sshll.u32 %s200, 4
          %s209 = int_to_ptr.vmem [resolvable:$true] %s208
          %211 = dma.hbm_to_vmem [thread:$0]  %s206, 64, %s209, %s197
        $region28: #{tpu_custom_call.1} parent=19 // pred_fallthru
          _
      $region20: #{tpu_custom_call.1} parent=5 // pred_fallthru
        _
      %p212 = scmp.le.s32.totalorder 1, %s16
      %p213 = scmp.lt.s32.totalorder %s16, 3
      %p214 = pnand %p212, %p213
      %p215 = pneg %p214
      // Predicated region
      $region29: #{tpu_custom_call.1} parent=5 // pred_check
        _
      $region30: #{tpu_custom_call.1} parent=5 // pred_check_branch
        %217 = sbr.rel (%p214) target = $region32
      $region31: #{tpu_custom_call.1} parent=5 // pred_region
        %s218 = ssub.s32 %s16, 1
        // Predicated region
        $region33: #{tpu_custom_call.1} parent=31 // pred_check
          %p219 = pneg %p54
        $region34: #{tpu_custom_call.1} parent=31 // pred_check_branch
          %221 = sbr.rel (%p219) target = $region36
        $region35: #{tpu_custom_call.1} parent=31 // pred_region
          %222 = dma.done [#allocation3], 1024
        $region36: #{tpu_custom_call.1} parent=31 // pred_fallthru
          _
        %s223 = sand.u32 %s21, 1
        %s224 = scalar_lea.sflag [#allocation6], %s223
        %s225 = sand.u32 %s69, 1
        %s226 = smul.addr %s225, 2048
        %s227 = scalar_lea.vmem [#allocation5], %s226
        // Predicated region
        $region37: #{tpu_custom_call.1} parent=31 // pred_check
          %p228 = pneg %p82
        $region38: #{tpu_custom_call.1} parent=31 // pred_check_branch
          %230 = sbr.rel (%p228) target = $region40
        $region39: #{tpu_custom_call.1} parent=31 // pred_region
          %231 = dma.done %s224, 32768
        $region40: #{tpu_custom_call.1} parent=31 // pred_fallthru
          _
        %s232 = sand.u32 %s21, 1
        %s233 = scalar_lea.sflag [#allocation6], %s232
        %s234 = sand.u32 %s95, 1
        %s235 = smul.addr %s234, 4
        %s236 = scalar_lea.vmem [#allocation7], %s235
        // Predicated region
        $region41: #{tpu_custom_call.1} parent=31 // pred_check
          %p237 = pneg %p108
        $region42: #{tpu_custom_call.1} parent=31 // pred_check_branch
          %239 = sbr.rel (%p237) target = $region44
        $region43: #{tpu_custom_call.1} parent=31 // pred_region
          %240 = dma.done %s233, 64
        $region44: #{tpu_custom_call.1} parent=31 // pred_fallthru
          _
        %p241 = pneg %p54
        %p242 = pneg %p51
        %s243 = sand.u32 %s21, 1
        %s244 = scalar_lea.sflag [#allocation6], %s243
        %s245 = sand.u32 %s69, 1
        %s246 = smul.addr %s245, 2048
        %s247 = scalar_lea.vmem [#allocation5], %s246
        %p248 = pneg %p82
        %p249 = pneg %p79
        %s250 = sand.u32 %s21, 1
        %s251 = scalar_lea.sflag [#allocation6], %s250
        %s252 = sand.u32 %s95, 1
        %s253 = smul.addr %s252, 4
        %s254 = scalar_lea.vmem [#allocation7], %s253
        %p255 = pneg %p108
        %p256 = pneg %p105
        %p257 = pneg %p134
        %p258 = pneg %p131
        %s259 = sand.u32 %s121, 1
        %s260 = scalar_lea.sflag [#allocation4], %s259
        %s261 = sand.u32 %s121, 1
        %s262 = smul.addr %s261, 64
        %s263 = scalar_lea.vmem [#allocation8], %s262
        %s264 = smul.u32 8, %s26
        %s265 = smul.u32 128, %s26
        %s266 = smul.u32 4, %s25
        %s267 = smul.u32 4, %s25
        %s268 = smul.u32 4, %s25
        %v269 = vld [vmem:[#allocation2] sm:$0xff]
        %v270 = vld [vmem:[#allocation2 + $0x8] sm:$0xff]
        %v271 = vld [vmem:[#allocation2 + $0x10] sm:$0xff]
        %v272 = vld [vmem:[#allocation2 + $0x18] sm:$0xff]
        %v273 = vld [vmem:[#allocation2 + $0x20] sm:$0xff]
        %v274 = vld [vmem:[#allocation2 + $0x28] sm:$0xff]
        %v275 = vld [vmem:[#allocation2 + $0x30] sm:$0xff]
        %v276 = vld [vmem:[#allocation2 + $0x38] sm:$0xff]
        %v277 = vld [vmem:[%s227] sm:$0xff]
        %v278 = vld [vmem:[%s227 + $0x8] sm:$0xff]
        %v279 = vld [vmem:[%s227 + $0x10] sm:$0xff]
        %v280 = vld [vmem:[%s227 + $0x18] sm:$0xff]
        %v281 = vld [vmem:[%s227 + $0x20] sm:$0xff]
        %v282 = vld [vmem:[%s227 + $0x28] sm:$0xff]
        %v283 = vld [vmem:[%s227 + $0x30] sm:$0xff]
        %v284 = vld [vmem:[%s227 + $0x38] sm:$0xff]
        %v285 = vld [vmem:[%s227 + $0x40] sm:$0xff]
        %v286 = vld [vmem:[%s227 + $0x48] sm:$0xff]
        %v287 = vld [vmem:[%s227 + $0x50] sm:$0xff]
        %v288 = vld [vmem:[%s227 + $0x58] sm:$0xff]
        %v289 = vld [vmem:[%s227 + $0x60] sm:$0xff]
        %v290 = vld [vmem:[%s227 + $0x68] sm:$0xff]
        %v291 = vld [vmem:[%s227 + $0x70] sm:$0xff]
        %v292 = vld [vmem:[%s227 + $0x78] sm:$0xff]
        %v293 = vld [vmem:[%s227 + $0x80] sm:$0xff]
        %v294 = vld [vmem:[%s227 + $0x88] sm:$0xff]
        %v295 = vld [vmem:[%s227 + $0x90] sm:$0xff]
        %v296 = vld [vmem:[%s227 + $0x98] sm:$0xff]
        %v297 = vld [vmem:[%s227 + $0xa0] sm:$0xff]
        %v298 = vld [vmem:[%s227 + $0xa8] sm:$0xff]
        %v299 = vld [vmem:[%s227 + $0xb0] sm:$0xff]
        %v300 = vld [vmem:[%s227 + $0xb8] sm:$0xff]
        %v301 = vld [vmem:[%s227 + $0xc0] sm:$0xff]
        %v302 = vld [vmem:[%s227 + $0xc8] sm:$0xff]
        %v303 = vld [vmem:[%s227 + $0xd0] sm:$0xff]
        %v304 = vld [vmem:[%s227 + $0xd8] sm:$0xff]
        %v305 = vld [vmem:[%s227 + $0xe0] sm:$0xff]
        %v306 = vld [vmem:[%s227 + $0xe8] sm:$0xff]
        %v307 = vld [vmem:[%s227 + $0xf0] sm:$0xff]
        %v308 = vld [vmem:[%s227 + $0xf8] sm:$0xff]
        %v309 = vld [vmem:[%s227 + $0x100] sm:$0xff]
        %v310 = vld [vmem:[%s227 + $0x108] sm:$0xff]
        %v311 = vld [vmem:[%s227 + $0x110] sm:$0xff]
        %v312 = vld [vmem:[%s227 + $0x118] sm:$0xff]
        %v313 = vld [vmem:[%s227 + $0x120] sm:$0xff]
        %v314 = vld [vmem:[%s227 + $0x128] sm:$0xff]
        %v315 = vld [vmem:[%s227 + $0x130] sm:$0xff]
        %v316 = vld [vmem:[%s227 + $0x138] sm:$0xff]
        %v317 = vld [vmem:[%s227 + $0x140] sm:$0xff]
        %v318 = vld [vmem:[%s227 + $0x148] sm:$0xff]
        %v319 = vld [vmem:[%s227 + $0x150] sm:$0xff]
        %v320 = vld [vmem:[%s227 + $0x158] sm:$0xff]
        %v321 = vld [vmem:[%s227 + $0x160] sm:$0xff]
        %v322 = vld [vmem:[%s227 + $0x168] sm:$0xff]
        %v323 = vld [vmem:[%s227 + $0x170] sm:$0xff]
        %v324 = vld [vmem:[%s227 + $0x178] sm:$0xff]
        %v325 = vld [vmem:[%s227 + $0x180] sm:$0xff]
        %v326 = vld [vmem:[%s227 + $0x188] sm:$0xff]
        %v327 = vld [vmem:[%s227 + $0x190] sm:$0xff]
        %v328 = vld [vmem:[%s227 + $0x198] sm:$0xff]
        %v329 = vld [vmem:[%s227 + $0x1a0] sm:$0xff]
        %v330 = vld [vmem:[%s227 + $0x1a8] sm:$0xff]
        %v331 = vld [vmem:[%s227 + $0x1b0] sm:$0xff]
        %v332 = vld [vmem:[%s227 + $0x1b8] sm:$0xff]
        %v333 = vld [vmem:[%s227 + $0x1c0] sm:$0xff]
        %v334 = vld [vmem:[%s227 + $0x1c8] sm:$0xff]
        %v335 = vld [vmem:[%s227 + $0x1d0] sm:$0xff]
        %v336 = vld [vmem:[%s227 + $0x1d8] sm:$0xff]
        %v337 = vld [vmem:[%s227 + $0x1e0] sm:$0xff]
        %v338 = vld [vmem:[%s227 + $0x1e8] sm:$0xff]
        %v339 = vld [vmem:[%s227 + $0x1f0] sm:$0xff]
        %v340 = vld [vmem:[%s227 + $0x1f8] sm:$0xff]
        %v341 = vld [vmem:[%s227 + $0x200] sm:$0xff]
        %v342 = vld [vmem:[%s227 + $0x208] sm:$0xff]
        %v343 = vld [vmem:[%s227 + $0x210] sm:$0xff]
        %v344 = vld [vmem:[%s227 + $0x218] sm:$0xff]
        %v345 = vld [vmem:[%s227 + $0x220] sm:$0xff]
        %v346 = vld [vmem:[%s227 + $0x228] sm:$0xff]
        %v347 = vld [vmem:[%s227 + $0x230] sm:$0xff]
        %v348 = vld [vmem:[%s227 + $0x238] sm:$0xff]
        %v349 = vld [vmem:[%s227 + $0x240] sm:$0xff]
        %v350 = vld [vmem:[%s227 + $0x248] sm:$0xff]
        %v351 = vld [vmem:[%s227 + $0x250] sm:$0xff]
        %v352 = vld [vmem:[%s227 + $0x258] sm:$0xff]
        %v353 = vld [vmem:[%s227 + $0x260] sm:$0xff]
        %v354 = vld [vmem:[%s227 + $0x268] sm:$0xff]
        %v355 = vld [vmem:[%s227 + $0x270] sm:$0xff]
        %v356 = vld [vmem:[%s227 + $0x278] sm:$0xff]
        %v357 = vld [vmem:[%s227 + $0x280] sm:$0xff]
        %v358 = vld [vmem:[%s227 + $0x288] sm:$0xff]
        %v359 = vld [vmem:[%s227 + $0x290] sm:$0xff]
        %v360 = vld [vmem:[%s227 + $0x298] sm:$0xff]
        %v361 = vld [vmem:[%s227 + $0x2a0] sm:$0xff]
        %v362 = vld [vmem:[%s227 + $0x2a8] sm:$0xff]
        %v363 = vld [vmem:[%s227 + $0x2b0] sm:$0xff]
        %v364 = vld [vmem:[%s227 + $0x2b8] sm:$0xff]
        %v365 = vld [vmem:[%s227 + $0x2c0] sm:$0xff]
        %v366 = vld [vmem:[%s227 + $0x2c8] sm:$0xff]
        %v367 = vld [vmem:[%s227 + $0x2d0] sm:$0xff]
        %v368 = vld [vmem:[%s227 + $0x2d8] sm:$0xff]
        %v369 = vld [vmem:[%s227 + $0x2e0] sm:$0xff]
        %v370 = vld [vmem:[%s227 + $0x2e8] sm:$0xff]
        %v371 = vld [vmem:[%s227 + $0x2f0] sm:$0xff]
        %v372 = vld [vmem:[%s227 + $0x2f8] sm:$0xff]
        %v373 = vld [vmem:[%s227 + $0x300] sm:$0xff]
        %v374 = vld [vmem:[%s227 + $0x308] sm:$0xff]
        %v375 = vld [vmem:[%s227 + $0x310] sm:$0xff]
        %v376 = vld [vmem:[%s227 + $0x318] sm:$0xff]
        %v377 = vld [vmem:[%s227 + $0x320] sm:$0xff]
        %v378 = vld [vmem:[%s227 + $0x328] sm:$0xff]
        %v379 = vld [vmem:[%s227 + $0x330] sm:$0xff]
        %v380 = vld [vmem:[%s227 + $0x338] sm:$0xff]
        %v381 = vld [vmem:[%s227 + $0x340] sm:$0xff]
        %v382 = vld [vmem:[%s227 + $0x348] sm:$0xff]
        %v383 = vld [vmem:[%s227 + $0x350] sm:$0xff]
        %v384 = vld [vmem:[%s227 + $0x358] sm:$0xff]
        %v385 = vld [vmem:[%s227 + $0x360] sm:$0xff]
        %v386 = vld [vmem:[%s227 + $0x368] sm:$0xff]
        %v387 = vld [vmem:[%s227 + $0x370] sm:$0xff]
        %v388 = vld [vmem:[%s227 + $0x378] sm:$0xff]
        %v389 = vld [vmem:[%s227 + $0x380] sm:$0xff]
        %v390 = vld [vmem:[%s227 + $0x388] sm:$0xff]
        %v391 = vld [vmem:[%s227 + $0x390] sm:$0xff]
        %v392 = vld [vmem:[%s227 + $0x398] sm:$0xff]
        %v393 = vld [vmem:[%s227 + $0x3a0] sm:$0xff]
        %v394 = vld [vmem:[%s227 + $0x3a8] sm:$0xff]
        %v395 = vld [vmem:[%s227 + $0x3b0] sm:$0xff]
        %v396 = vld [vmem:[%s227 + $0x3b8] sm:$0xff]
        %v397 = vld [vmem:[%s227 + $0x3c0] sm:$0xff]
        %v398 = vld [vmem:[%s227 + $0x3c8] sm:$0xff]
        %v399 = vld [vmem:[%s227 + $0x3d0] sm:$0xff]
        %v400 = vld [vmem:[%s227 + $0x3d8] sm:$0xff]
        %v401 = vld [vmem:[%s227 + $0x3e0] sm:$0xff]
        %v402 = vld [vmem:[%s227 + $0x3e8] sm:$0xff]
        %v403 = vld [vmem:[%s227 + $0x3f0] sm:$0xff]
        %v404 = vld [vmem:[%s227 + $0x3f8] sm:$0xff]
        %v405 = vld [vmem:[%s227 + $0x400] sm:$0xff]
        %v406 = vld [vmem:[%s227 + $0x408] sm:$0xff]
        %v407 = vld [vmem:[%s227 + $0x410] sm:$0xff]
        %v408 = vld [vmem:[%s227 + $0x418] sm:$0xff]
        %v409 = vld [vmem:[%s227 + $0x420] sm:$0xff]
        %v410 = vld [vmem:[%s227 + $0x428] sm:$0xff]
        %v411 = vld [vmem:[%s227 + $0x430] sm:$0xff]
        %v412 = vld [vmem:[%s227 + $0x438] sm:$0xff]
        %v413 = vld [vmem:[%s227 + $0x440] sm:$0xff]
        %v414 = vld [vmem:[%s227 + $0x448] sm:$0xff]
        %v415 = vld [vmem:[%s227 + $0x450] sm:$0xff]
        %v416 = vld [vmem:[%s227 + $0x458] sm:$0xff]
        %v417 = vld [vmem:[%s227 + $0x460] sm:$0xff]
        %v418 = vld [vmem:[%s227 + $0x468] sm:$0xff]
        %v419 = vld [vmem:[%s227 + $0x470] sm:$0xff]
        %v420 = vld [vmem:[%s227 + $0x478] sm:$0xff]
        %v421 = vld [vmem:[%s227 + $0x480] sm:$0xff]
        %v422 = vld [vmem:[%s227 + $0x488] sm:$0xff]
        %v423 = vld [vmem:[%s227 + $0x490] sm:$0xff]
        %v424 = vld [vmem:[%s227 + $0x498] sm:$0xff]
        %v425 = vld [vmem:[%s227 + $0x4a0] sm:$0xff]
        %v426 = vld [vmem:[%s227 + $0x4a8] sm:$0xff]
        %v427 = vld [vmem:[%s227 + $0x4b0] sm:$0xff]
        %v428 = vld [vmem:[%s227 + $0x4b8] sm:$0xff]
        %v429 = vld [vmem:[%s227 + $0x4c0] sm:$0xff]
        %v430 = vld [vmem:[%s227 + $0x4c8] sm:$0xff]
        %v431 = vld [vmem:[%s227 + $0x4d0] sm:$0xff]
        %v432 = vld [vmem:[%s227 + $0x4d8] sm:$0xff]
        %v433 = vld [vmem:[%s227 + $0x4e0] sm:$0xff]
        %v434 = vld [vmem:[%s227 + $0x4e8] sm:$0xff]
        %v435 = vld [vmem:[%s227 + $0x4f0] sm:$0xff]
        %v436 = vld [vmem:[%s227 + $0x4f8] sm:$0xff]
        %v437 = vld [vmem:[%s227 + $0x500] sm:$0xff]
        %v438 = vld [vmem:[%s227 + $0x508] sm:$0xff]
        %v439 = vld [vmem:[%s227 + $0x510] sm:$0xff]
        %v440 = vld [vmem:[%s227 + $0x518] sm:$0xff]
        %v441 = vld [vmem:[%s227 + $0x520] sm:$0xff]
        %v442 = vld [vmem:[%s227 + $0x528] sm:$0xff]
        %v443 = vld [vmem:[%s227 + $0x530] sm:$0xff]
        %v444 = vld [vmem:[%s227 + $0x538] sm:$0xff]
        %v445 = vld [vmem:[%s227 + $0x540] sm:$0xff]
        %v446 = vld [vmem:[%s227 + $0x548] sm:$0xff]
        %v447 = vld [vmem:[%s227 + $0x550] sm:$0xff]
        %v448 = vld [vmem:[%s227 + $0x558] sm:$0xff]
        %v449 = vld [vmem:[%s227 + $0x560] sm:$0xff]
        %v450 = vld [vmem:[%s227 + $0x568] sm:$0xff]
        %v451 = vld [vmem:[%s227 + $0x570] sm:$0xff]
        %v452 = vld [vmem:[%s227 + $0x578] sm:$0xff]
        %v453 = vld [vmem:[%s227 + $0x580] sm:$0xff]
        %v454 = vld [vmem:[%s227 + $0x588] sm:$0xff]
        %v455 = vld [vmem:[%s227 + $0x590] sm:$0xff]
        %v456 = vld [vmem:[%s227 + $0x598] sm:$0xff]
        %v457 = vld [vmem:[%s227 + $0x5a0] sm:$0xff]
        %v458 = vld [vmem:[%s227 + $0x5a8] sm:$0xff]
        %v459 = vld [vmem:[%s227 + $0x5b0] sm:$0xff]
        %v460 = vld [vmem:[%s227 + $0x5b8] sm:$0xff]
        %v461 = vld [vmem:[%s227 + $0x5c0] sm:$0xff]
        %v462 = vld [vmem:[%s227 + $0x5c8] sm:$0xff]
        %v463 = vld [vmem:[%s227 + $0x5d0] sm:$0xff]
        %v464 = vld [vmem:[%s227 + $0x5d8] sm:$0xff]
        %v465 = vld [vmem:[%s227 + $0x5e0] sm:$0xff]
        %v466 = vld [vmem:[%s227 + $0x5e8] sm:$0xff]
        %v467 = vld [vmem:[%s227 + $0x5f0] sm:$0xff]
        %v468 = vld [vmem:[%s227 + $0x5f8] sm:$0xff]
        %v469 = vld [vmem:[%s227 + $0x600] sm:$0xff]
        %v470 = vld [vmem:[%s227 + $0x608] sm:$0xff]
        %v471 = vld [vmem:[%s227 + $0x610] sm:$0xff]
        %v472 = vld [vmem:[%s227 + $0x618] sm:$0xff]
        %v473 = vld [vmem:[%s227 + $0x620] sm:$0xff]
        %v474 = vld [vmem:[%s227 + $0x628] sm:$0xff]
        %v475 = vld [vmem:[%s227 + $0x630] sm:$0xff]
        %v476 = vld [vmem:[%s227 + $0x638] sm:$0xff]
        %v477 = vld [vmem:[%s227 + $0x640] sm:$0xff]
        %v478 = vld [vmem:[%s227 + $0x648] sm:$0xff]
        %v479 = vld [vmem:[%s227 + $0x650] sm:$0xff]
        %v480 = vld [vmem:[%s227 + $0x658] sm:$0xff]
        %v481 = vld [vmem:[%s227 + $0x660] sm:$0xff]
        %v482 = vld [vmem:[%s227 + $0x668] sm:$0xff]
        %v483 = vld [vmem:[%s227 + $0x670] sm:$0xff]
        %v484 = vld [vmem:[%s227 + $0x678] sm:$0xff]
        %v485 = vld [vmem:[%s227 + $0x680] sm:$0xff]
        %v486 = vld [vmem:[%s227 + $0x688] sm:$0xff]
        %v487 = vld [vmem:[%s227 + $0x690] sm:$0xff]
        %v488 = vld [vmem:[%s227 + $0x698] sm:$0xff]
        %v489 = vld [vmem:[%s227 + $0x6a0] sm:$0xff]
        %v490 = vld [vmem:[%s227 + $0x6a8] sm:$0xff]
        %v491 = vld [vmem:[%s227 + $0x6b0] sm:$0xff]
        %v492 = vld [vmem:[%s227 + $0x6b8] sm:$0xff]
        %v493 = vld [vmem:[%s227 + $0x6c0] sm:$0xff]
        %v494 = vld [vmem:[%s227 + $0x6c8] sm:$0xff]
        %v495 = vld [vmem:[%s227 + $0x6d0] sm:$0xff]
        %v496 = vld [vmem:[%s227 + $0x6d8] sm:$0xff]
        %v497 = vld [vmem:[%s227 + $0x6e0] sm:$0xff]
        %v498 = vld [vmem:[%s227 + $0x6e8] sm:$0xff]
        %v499 = vld [vmem:[%s227 + $0x6f0] sm:$0xff]
        %v500 = vld [vmem:[%s227 + $0x6f8] sm:$0xff]
        %v501 = vld [vmem:[%s227 + $0x700] sm:$0xff]
        %v502 = vld [vmem:[%s227 + $0x708] sm:$0xff]
        %v503 = vld [vmem:[%s227 + $0x710] sm:$0xff]
        %v504 = vld [vmem:[%s227 + $0x718] sm:$0xff]
        %v505 = vld [vmem:[%s227 + $0x720] sm:$0xff]
        %v506 = vld [vmem:[%s227 + $0x728] sm:$0xff]
        %v507 = vld [vmem:[%s227 + $0x730] sm:$0xff]
        %v508 = vld [vmem:[%s227 + $0x738] sm:$0xff]
        %v509 = vld [vmem:[%s227 + $0x740] sm:$0xff]
        %v510 = vld [vmem:[%s227 + $0x748] sm:$0xff]
        %v511 = vld [vmem:[%s227 + $0x750] sm:$0xff]
        %v512 = vld [vmem:[%s227 + $0x758] sm:$0xff]
        %v513 = vld [vmem:[%s227 + $0x760] sm:$0xff]
        %v514 = vld [vmem:[%s227 + $0x768] sm:$0xff]
        %v515 = vld [vmem:[%s227 + $0x770] sm:$0xff]
        %v516 = vld [vmem:[%s227 + $0x778] sm:$0xff]
        %v517 = vld [vmem:[%s227 + $0x780] sm:$0xff]
        %v518 = vld [vmem:[%s227 + $0x788] sm:$0xff]
        %v519 = vld [vmem:[%s227 + $0x790] sm:$0xff]
        %v520 = vld [vmem:[%s227 + $0x798] sm:$0xff]
        %v521 = vld [vmem:[%s227 + $0x7a0] sm:$0xff]
        %v522 = vld [vmem:[%s227 + $0x7a8] sm:$0xff]
        %v523 = vld [vmem:[%s227 + $0x7b0] sm:$0xff]
        %v524 = vld [vmem:[%s227 + $0x7b8] sm:$0xff]
        %v525 = vld [vmem:[%s227 + $0x7c0] sm:$0xff]
        %v526 = vld [vmem:[%s227 + $0x7c8] sm:$0xff]
        %v527 = vld [vmem:[%s227 + $0x7d0] sm:$0xff]
        %v528 = vld [vmem:[%s227 + $0x7d8] sm:$0xff]
        %v529 = vld [vmem:[%s227 + $0x7e0] sm:$0xff]
        %v530 = vld [vmem:[%s227 + $0x7e8] sm:$0xff]
        %v531 = vld [vmem:[%s227 + $0x7f0] sm:$0xff]
        %v532 = vld [vmem:[%s227 + $0x7f8] sm:$0xff]
        %v541 = vunpack.c.l.b16 %v269
        %v542 = vunpack.c.h.b16 %v269
        %v543 = vunpack.c.l.b16 %v270
        %v544 = vunpack.c.h.b16 %v270
        %v545 = vunpack.c.l.b16 %v271
        %v546 = vunpack.c.h.b16 %v271
        %v547 = vunpack.c.l.b16 %v272
        %v548 = vunpack.c.h.b16 %v272
        %v549 = vunpack.c.l.b16 %v273
        %v550 = vunpack.c.h.b16 %v273
        %v551 = vunpack.c.l.b16 %v274
        %v552 = vunpack.c.h.b16 %v274
        %v553 = vunpack.c.l.b16 %v275
        %v554 = vunpack.c.h.b16 %v275
        %v555 = vunpack.c.l.b16 %v276
        %v556 = vunpack.c.h.b16 %v276
        %v557 = vpack.c.b16 %v549, %v541
        %v558 = vpack.c.b16 %v550, %v542
        %v559 = vpack.c.b16 %v551, %v543
        %v560 = vpack.c.b16 %v552, %v544
        %v561 = vpack.c.b16 %v553, %v545
        %v562 = vpack.c.b16 %v554, %v546
        %v563 = vpack.c.b16 %v555, %v547
        %v564 = vpack.c.b16 %v556, %v548
        %v829 = vunpack.c.l.b16 %v277
        %v830 = vunpack.c.h.b16 %v277
        %v831 = vunpack.c.l.b16 %v278
        %v832 = vunpack.c.h.b16 %v278
        %v833 = vunpack.c.l.b16 %v279
        %v834 = vunpack.c.h.b16 %v279
        %v835 = vunpack.c.l.b16 %v280
        %v836 = vunpack.c.h.b16 %v280
        %v837 = vunpack.c.l.b16 %v281
        %v838 = vunpack.c.h.b16 %v281
        %v839 = vunpack.c.l.b16 %v282
        %v840 = vunpack.c.h.b16 %v282
        %v841 = vunpack.c.l.b16 %v283
        %v842 = vunpack.c.h.b16 %v283
        %v843 = vunpack.c.l.b16 %v284
        %v844 = vunpack.c.h.b16 %v284
        %v845 = vunpack.c.l.b16 %v285
        %v846 = vunpack.c.h.b16 %v285
        %v847 = vunpack.c.l.b16 %v286
        %v848 = vunpack.c.h.b16 %v286
        %v849 = vunpack.c.l.b16 %v287
        %v850 = vunpack.c.h.b16 %v287
        %v851 = vunpack.c.l.b16 %v288
        %v852 = vunpack.c.h.b16 %v288
        %v853 = vunpack.c.l.b16 %v289
        %v854 = vunpack.c.h.b16 %v289
        %v855 = vunpack.c.l.b16 %v290
        %v856 = vunpack.c.h.b16 %v290
        %v857 = vunpack.c.l.b16 %v291
        %v858 = vunpack.c.h.b16 %v291
        %v859 = vunpack.c.l.b16 %v292
        %v860 = vunpack.c.h.b16 %v292
        %v861 = vunpack.c.l.b16 %v293
        %v862 = vunpack.c.h.b16 %v293
        %v863 = vunpack.c.l.b16 %v294
        %v864 = vunpack.c.h.b16 %v294
        %v865 = vunpack.c.l.b16 %v295
        %v866 = vunpack.c.h.b16 %v295
        %v867 = vunpack.c.l.b16 %v296
        %v868 = vunpack.c.h.b16 %v296
        %v869 = vunpack.c.l.b16 %v297
        %v870 = vunpack.c.h.b16 %v297
        %v871 = vunpack.c.l.b16 %v298
        %v872 = vunpack.c.h.b16 %v298
        %v873 = vunpack.c.l.b16 %v299
        %v874 = vunpack.c.h.b16 %v299
        %v875 = vunpack.c.l.b16 %v300
        %v876 = vunpack.c.h.b16 %v300
        %v877 = vunpack.c.l.b16 %v301
        %v878 = vunpack.c.h.b16 %v301
        %v879 = vunpack.c.l.b16 %v302
        %v880 = vunpack.c.h.b16 %v302
        %v881 = vunpack.c.l.b16 %v303
        %v882 = vunpack.c.h.b16 %v303
        %v883 = vunpack.c.l.b16 %v304
        %v884 = vunpack.c.h.b16 %v304
        %v885 = vunpack.c.l.b16 %v305
        %v886 = vunpack.c.h.b16 %v305
        %v887 = vunpack.c.l.b16 %v306
        %v888 = vunpack.c.h.b16 %v306
        %v889 = vunpack.c.l.b16 %v307
        %v890 = vunpack.c.h.b16 %v307
        %v891 = vunpack.c.l.b16 %v308
        %v892 = vunpack.c.h.b16 %v308
        %v893 = vunpack.c.l.b16 %v309
        %v894 = vunpack.c.h.b16 %v309
        %v895 = vunpack.c.l.b16 %v310
        %v896 = vunpack.c.h.b16 %v310
        %v897 = vunpack.c.l.b16 %v311
        %v898 = vunpack.c.h.b16 %v311
        %v899 = vunpack.c.l.b16 %v312
        %v900 = vunpack.c.h.b16 %v312
        %v901 = vunpack.c.l.b16 %v313
        %v902 = vunpack.c.h.b16 %v313
        %v903 = vunpack.c.l.b16 %v314
        %v904 = vunpack.c.h.b16 %v314
        %v905 = vunpack.c.l.b16 %v315
        %v906 = vunpack.c.h.b16 %v315
        %v907 = vunpack.c.l.b16 %v316
        %v908 = vunpack.c.h.b16 %v316
        %v909 = vunpack.c.l.b16 %v317
        %v910 = vunpack.c.h.b16 %v317
        %v911 = vunpack.c.l.b16 %v318
        %v912 = vunpack.c.h.b16 %v318
        %v913 = vunpack.c.l.b16 %v319
        %v914 = vunpack.c.h.b16 %v319
        %v915 = vunpack.c.l.b16 %v320
        %v916 = vunpack.c.h.b16 %v320
        %v917 = vunpack.c.l.b16 %v321
        %v918 = vunpack.c.h.b16 %v321
        %v919 = vunpack.c.l.b16 %v322
        %v920 = vunpack.c.h.b16 %v322
        %v921 = vunpack.c.l.b16 %v323
        %v922 = vunpack.c.h.b16 %v323
        %v923 = vunpack.c.l.b16 %v324
        %v924 = vunpack.c.h.b16 %v324
        %v925 = vunpack.c.l.b16 %v325
        %v926 = vunpack.c.h.b16 %v325
        %v927 = vunpack.c.l.b16 %v326
        %v928 = vunpack.c.h.b16 %v326
        %v929 = vunpack.c.l.b16 %v327
        %v930 = vunpack.c.h.b16 %v327
        %v931 = vunpack.c.l.b16 %v328
        %v932 = vunpack.c.h.b16 %v328
        %v933 = vunpack.c.l.b16 %v329
        %v934 = vunpack.c.h.b16 %v329
        %v935 = vunpack.c.l.b16 %v330
        %v936 = vunpack.c.h.b16 %v330
        %v937 = vunpack.c.l.b16 %v331
        %v938 = vunpack.c.h.b16 %v331
        %v939 = vunpack.c.l.b16 %v332
        %v940 = vunpack.c.h.b16 %v332
        %v941 = vunpack.c.l.b16 %v333
        %v942 = vunpack.c.h.b16 %v333
        %v943 = vunpack.c.l.b16 %v334
        %v944 = vunpack.c.h.b16 %v334
        %v945 = vunpack.c.l.b16 %v335
        %v946 = vunpack.c.h.b16 %v335
        %v947 = vunpack.c.l.b16 %v336
        %v948 = vunpack.c.h.b16 %v336
        %v949 = vunpack.c.l.b16 %v337
        %v950 = vunpack.c.h.b16 %v337
        %v951 = vunpack.c.l.b16 %v338
        %v952 = vunpack.c.h.b16 %v338
        %v953 = vunpack.c.l.b16 %v339
        %v954 = vunpack.c.h.b16 %v339
        %v955 = vunpack.c.l.b16 %v340
        %v956 = vunpack.c.h.b16 %v340
        %v957 = vunpack.c.l.b16 %v341
        %v958 = vunpack.c.h.b16 %v341
        %v959 = vunpack.c.l.b16 %v342
        %v960 = vunpack.c.h.b16 %v342
        %v961 = vunpack.c.l.b16 %v343
        %v962 = vunpack.c.h.b16 %v343
        %v963 = vunpack.c.l.b16 %v344
        %v964 = vunpack.c.h.b16 %v344
        %v965 = vunpack.c.l.b16 %v345
        %v966 = vunpack.c.h.b16 %v345
        %v967 = vunpack.c.l.b16 %v346
        %v968 = vunpack.c.h.b16 %v346
        %v969 = vunpack.c.l.b16 %v347
        %v970 = vunpack.c.h.b16 %v347
        %v971 = vunpack.c.l.b16 %v348
        %v972 = vunpack.c.h.b16 %v348
        %v973 = vunpack.c.l.b16 %v349
        %v974 = vunpack.c.h.b16 %v349
        %v975 = vunpack.c.l.b16 %v350
        %v976 = vunpack.c.h.b16 %v350
        %v977 = vunpack.c.l.b16 %v351
        %v978 = vunpack.c.h.b16 %v351
        %v979 = vunpack.c.l.b16 %v352
        %v980 = vunpack.c.h.b16 %v352
        %v981 = vunpack.c.l.b16 %v353
        %v982 = vunpack.c.h.b16 %v353
        %v983 = vunpack.c.l.b16 %v354
        %v984 = vunpack.c.h.b16 %v354
        %v985 = vunpack.c.l.b16 %v355
        %v986 = vunpack.c.h.b16 %v355
        %v987 = vunpack.c.l.b16 %v356
        %v988 = vunpack.c.h.b16 %v356
        %v989 = vunpack.c.l.b16 %v357
        %v990 = vunpack.c.h.b16 %v357
        %v991 = vunpack.c.l.b16 %v358
        %v992 = vunpack.c.h.b16 %v358
        %v993 = vunpack.c.l.b16 %v359
        %v994 = vunpack.c.h.b16 %v359
        %v995 = vunpack.c.l.b16 %v360
        %v996 = vunpack.c.h.b16 %v360
        %v997 = vunpack.c.l.b16 %v361
        %v998 = vunpack.c.h.b16 %v361
        %v999 = vunpack.c.l.b16 %v362
        %v1000 = vunpack.c.h.b16 %v362
        %v1001 = vunpack.c.l.b16 %v363
        %v1002 = vunpack.c.h.b16 %v363
        %v1003 = vunpack.c.l.b16 %v364
        %v1004 = vunpack.c.h.b16 %v364
        %v1005 = vunpack.c.l.b16 %v365
        %v1006 = vunpack.c.h.b16 %v365
        %v1007 = vunpack.c.l.b16 %v366
        %v1008 = vunpack.c.h.b16 %v366
        %v1009 = vunpack.c.l.b16 %v367
        %v1010 = vunpack.c.h.b16 %v367
        %v1011 = vunpack.c.l.b16 %v368
        %v1012 = vunpack.c.h.b16 %v368
        %v1013 = vunpack.c.l.b16 %v369
        %v1014 = vunpack.c.h.b16 %v369
        %v1015 = vunpack.c.l.b16 %v370
        %v1016 = vunpack.c.h.b16 %v370
        %v1017 = vunpack.c.l.b16 %v371
        %v1018 = vunpack.c.h.b16 %v371
        %v1019 = vunpack.c.l.b16 %v372
        %v1020 = vunpack.c.h.b16 %v372
        %v1021 = vunpack.c.l.b16 %v373
        %v1022 = vunpack.c.h.b16 %v373
        %v1023 = vunpack.c.l.b16 %v374
        %v1024 = vunpack.c.h.b16 %v374
        %v1025 = vunpack.c.l.b16 %v375
        %v1026 = vunpack.c.h.b16 %v375
        %v1027 = vunpack.c.l.b16 %v376
        %v1028 = vunpack.c.h.b16 %v376
        %v1029 = vunpack.c.l.b16 %v377
        %v1030 = vunpack.c.h.b16 %v377
        %v1031 = vunpack.c.l.b16 %v378
        %v1032 = vunpack.c.h.b16 %v378
        %v1033 = vunpack.c.l.b16 %v379
        %v1034 = vunpack.c.h.b16 %v379
        %v1035 = vunpack.c.l.b16 %v380
        %v1036 = vunpack.c.h.b16 %v380
        %v1037 = vunpack.c.l.b16 %v381
        %v1038 = vunpack.c.h.b16 %v381
        %v1039 = vunpack.c.l.b16 %v382
        %v1040 = vunpack.c.h.b16 %v382
        %v1041 = vunpack.c.l.b16 %v383
        %v1042 = vunpack.c.h.b16 %v383
        %v1043 = vunpack.c.l.b16 %v384
        %v1044 = vunpack.c.h.b16 %v384
        %v1045 = vunpack.c.l.b16 %v385
        %v1046 = vunpack.c.h.b16 %v385
        %v1047 = vunpack.c.l.b16 %v386
        %v1048 = vunpack.c.h.b16 %v386
        %v1049 = vunpack.c.l.b16 %v387
        %v1050 = vunpack.c.h.b16 %v387
        %v1051 = vunpack.c.l.b16 %v388
        %v1052 = vunpack.c.h.b16 %v388
        %v1053 = vunpack.c.l.b16 %v389
        %v1054 = vunpack.c.h.b16 %v389
        %v1055 = vunpack.c.l.b16 %v390
        %v1056 = vunpack.c.h.b16 %v390
        %v1057 = vunpack.c.l.b16 %v391
        %v1058 = vunpack.c.h.b16 %v391
        %v1059 = vunpack.c.l.b16 %v392
        %v1060 = vunpack.c.h.b16 %v392
        %v1061 = vunpack.c.l.b16 %v393
        %v1062 = vunpack.c.h.b16 %v393
        %v1063 = vunpack.c.l.b16 %v394
        %v1064 = vunpack.c.h.b16 %v394
        %v1065 = vunpack.c.l.b16 %v395
        %v1066 = vunpack.c.h.b16 %v395
        %v1067 = vunpack.c.l.b16 %v396
        %v1068 = vunpack.c.h.b16 %v396
        %v1069 = vunpack.c.l.b16 %v397
        %v1070 = vunpack.c.h.b16 %v397
        %v1071 = vunpack.c.l.b16 %v398
        %v1072 = vunpack.c.h.b16 %v398
        %v1073 = vunpack.c.l.b16 %v399
        %v1074 = vunpack.c.h.b16 %v399
        %v1075 = vunpack.c.l.b16 %v400
        %v1076 = vunpack.c.h.b16 %v400
        %v1077 = vunpack.c.l.b16 %v401
        %v1078 = vunpack.c.h.b16 %v401
        %v1079 = vunpack.c.l.b16 %v402
        %v1080 = vunpack.c.h.b16 %v402
        %v1081 = vunpack.c.l.b16 %v403
        %v1082 = vunpack.c.h.b16 %v403
        %v1083 = vunpack.c.l.b16 %v404
        %v1084 = vunpack.c.h.b16 %v404
        %v1085 = vunpack.c.l.b16 %v405
        %v1086 = vunpack.c.h.b16 %v405
        %v1087 = vunpack.c.l.b16 %v406
        %v1088 = vunpack.c.h.b16 %v406
        %v1089 = vunpack.c.l.b16 %v407
        %v1090 = vunpack.c.h.b16 %v407
        %v1091 = vunpack.c.l.b16 %v408
        %v1092 = vunpack.c.h.b16 %v408
        %v1093 = vunpack.c.l.b16 %v409
        %v1094 = vunpack.c.h.b16 %v409
        %v1095 = vunpack.c.l.b16 %v410
        %v1096 = vunpack.c.h.b16 %v410
        %v1097 = vunpack.c.l.b16 %v411
        %v1098 = vunpack.c.h.b16 %v411
        %v1099 = vunpack.c.l.b16 %v412
        %v1100 = vunpack.c.h.b16 %v412
        %v1101 = vunpack.c.l.b16 %v413
        %v1102 = vunpack.c.h.b16 %v413
        %v1103 = vunpack.c.l.b16 %v414
        %v1104 = vunpack.c.h.b16 %v414
        %v1105 = vunpack.c.l.b16 %v415
        %v1106 = vunpack.c.h.b16 %v415
        %v1107 = vunpack.c.l.b16 %v416
        %v1108 = vunpack.c.h.b16 %v416
        %v1109 = vunpack.c.l.b16 %v417
        %v1110 = vunpack.c.h.b16 %v417
        %v1111 = vunpack.c.l.b16 %v418
        %v1112 = vunpack.c.h.b16 %v418
        %v1113 = vunpack.c.l.b16 %v419
        %v1114 = vunpack.c.h.b16 %v419
        %v1115 = vunpack.c.l.b16 %v420
        %v1116 = vunpack.c.h.b16 %v420
        %v1117 = vunpack.c.l.b16 %v421
        %v1118 = vunpack.c.h.b16 %v421
        %v1119 = vunpack.c.l.b16 %v422
        %v1120 = vunpack.c.h.b16 %v422
        %v1121 = vunpack.c.l.b16 %v423
        %v1122 = vunpack.c.h.b16 %v423
        %v1123 = vunpack.c.l.b16 %v424
        %v1124 = vunpack.c.h.b16 %v424
        %v1125 = vunpack.c.l.b16 %v425
        %v1126 = vunpack.c.h.b16 %v425
        %v1127 = vunpack.c.l.b16 %v426
        %v1128 = vunpack.c.h.b16 %v426
        %v1129 = vunpack.c.l.b16 %v427
        %v1130 = vunpack.c.h.b16 %v427
        %v1131 = vunpack.c.l.b16 %v428
        %v1132 = vunpack.c.h.b16 %v428
        %v1133 = vunpack.c.l.b16 %v429
        %v1134 = vunpack.c.h.b16 %v429
        %v1135 = vunpack.c.l.b16 %v430
        %v1136 = vunpack.c.h.b16 %v430
        %v1137 = vunpack.c.l.b16 %v431
        %v1138 = vunpack.c.h.b16 %v431
        %v1139 = vunpack.c.l.b16 %v432
        %v1140 = vunpack.c.h.b16 %v432
        %v1141 = vunpack.c.l.b16 %v433
        %v1142 = vunpack.c.h.b16 %v433
        %v1143 = vunpack.c.l.b16 %v434
        %v1144 = vunpack.c.h.b16 %v434
        %v1145 = vunpack.c.l.b16 %v435
        %v1146 = vunpack.c.h.b16 %v435
        %v1147 = vunpack.c.l.b16 %v436
        %v1148 = vunpack.c.h.b16 %v436
        %v1149 = vunpack.c.l.b16 %v437
        %v1150 = vunpack.c.h.b16 %v437
        %v1151 = vunpack.c.l.b16 %v438
        %v1152 = vunpack.c.h.b16 %v438
        %v1153 = vunpack.c.l.b16 %v439
        %v1154 = vunpack.c.h.b16 %v439
        %v1155 = vunpack.c.l.b16 %v440
        %v1156 = vunpack.c.h.b16 %v440
        %v1157 = vunpack.c.l.b16 %v441
        %v1158 = vunpack.c.h.b16 %v441
        %v1159 = vunpack.c.l.b16 %v442
        %v1160 = vunpack.c.h.b16 %v442
        %v1161 = vunpack.c.l.b16 %v443
        %v1162 = vunpack.c.h.b16 %v443
        %v1163 = vunpack.c.l.b16 %v444
        %v1164 = vunpack.c.h.b16 %v444
        %v1165 = vunpack.c.l.b16 %v445
        %v1166 = vunpack.c.h.b16 %v445
        %v1167 = vunpack.c.l.b16 %v446
        %v1168 = vunpack.c.h.b16 %v446
        %v1169 = vunpack.c.l.b16 %v447
        %v1170 = vunpack.c.h.b16 %v447
        %v1171 = vunpack.c.l.b16 %v448
        %v1172 = vunpack.c.h.b16 %v448
        %v1173 = vunpack.c.l.b16 %v449
        %v1174 = vunpack.c.h.b16 %v449
        %v1175 = vunpack.c.l.b16 %v450
        %v1176 = vunpack.c.h.b16 %v450
        %v1177 = vunpack.c.l.b16 %v451
        %v1178 = vunpack.c.h.b16 %v451
        %v1179 = vunpack.c.l.b16 %v452
        %v1180 = vunpack.c.h.b16 %v452
        %v1181 = vunpack.c.l.b16 %v453
        %v1182 = vunpack.c.h.b16 %v453
        %v1183 = vunpack.c.l.b16 %v454
        %v1184 = vunpack.c.h.b16 %v454
        %v1185 = vunpack.c.l.b16 %v455
        %v1186 = vunpack.c.h.b16 %v455
        %v1187 = vunpack.c.l.b16 %v456
        %v1188 = vunpack.c.h.b16 %v456
        %v1189 = vunpack.c.l.b16 %v457
        %v1190 = vunpack.c.h.b16 %v457
        %v1191 = vunpack.c.l.b16 %v458
        %v1192 = vunpack.c.h.b16 %v458
        %v1193 = vunpack.c.l.b16 %v459
        %v1194 = vunpack.c.h.b16 %v459
        %v1195 = vunpack.c.l.b16 %v460
        %v1196 = vunpack.c.h.b16 %v460
        %v1197 = vunpack.c.l.b16 %v461
        %v1198 = vunpack.c.h.b16 %v461
        %v1199 = vunpack.c.l.b16 %v462
        %v1200 = vunpack.c.h.b16 %v462
        %v1201 = vunpack.c.l.b16 %v463
        %v1202 = vunpack.c.h.b16 %v463
        %v1203 = vunpack.c.l.b16 %v464
        %v1204 = vunpack.c.h.b16 %v464
        %v1205 = vunpack.c.l.b16 %v465
        %v1206 = vunpack.c.h.b16 %v465
        %v1207 = vunpack.c.l.b16 %v466
        %v1208 = vunpack.c.h.b16 %v466
        %v1209 = vunpack.c.l.b16 %v467
        %v1210 = vunpack.c.h.b16 %v467
        %v1211 = vunpack.c.l.b16 %v468
        %v1212 = vunpack.c.h.b16 %v468
        %v1213 = vunpack.c.l.b16 %v469
        %v1214 = vunpack.c.h.b16 %v469
        %v1215 = vunpack.c.l.b16 %v470
        %v1216 = vunpack.c.h.b16 %v470
        %v1217 = vunpack.c.l.b16 %v471
        %v1218 = vunpack.c.h.b16 %v471
        %v1219 = vunpack.c.l.b16 %v472
        %v1220 = vunpack.c.h.b16 %v472
        %v1221 = vunpack.c.l.b16 %v473
        %v1222 = vunpack.c.h.b16 %v473
        %v1223 = vunpack.c.l.b16 %v474
        %v1224 = vunpack.c.h.b16 %v474
        %v1225 = vunpack.c.l.b16 %v475
        %v1226 = vunpack.c.h.b16 %v475
        %v1227 = vunpack.c.l.b16 %v476
        %v1228 = vunpack.c.h.b16 %v476
        %v1229 = vunpack.c.l.b16 %v477
        %v1230 = vunpack.c.h.b16 %v477
        %v1231 = vunpack.c.l.b16 %v478
        %v1232 = vunpack.c.h.b16 %v478
        %v1233 = vunpack.c.l.b16 %v479
        %v1234 = vunpack.c.h.b16 %v479
        %v1235 = vunpack.c.l.b16 %v480
        %v1236 = vunpack.c.h.b16 %v480
        %v1237 = vunpack.c.l.b16 %v481
        %v1238 = vunpack.c.h.b16 %v481
        %v1239 = vunpack.c.l.b16 %v482
        %v1240 = vunpack.c.h.b16 %v482
        %v1241 = vunpack.c.l.b16 %v483
        %v1242 = vunpack.c.h.b16 %v483
        %v1243 = vunpack.c.l.b16 %v484
        %v1244 = vunpack.c.h.b16 %v484
        %v1245 = vunpack.c.l.b16 %v485
        %v1246 = vunpack.c.h.b16 %v485
        %v1247 = vunpack.c.l.b16 %v486
        %v1248 = vunpack.c.h.b16 %v486
        %v1249 = vunpack.c.l.b16 %v487
        %v1250 = vunpack.c.h.b16 %v487
        %v1251 = vunpack.c.l.b16 %v488
        %v1252 = vunpack.c.h.b16 %v488
        %v1253 = vunpack.c.l.b16 %v489
        %v1254 = vunpack.c.h.b16 %v489
        %v1255 = vunpack.c.l.b16 %v490
        %v1256 = vunpack.c.h.b16 %v490
        %v1257 = vunpack.c.l.b16 %v491
        %v1258 = vunpack.c.h.b16 %v491
        %v1259 = vunpack.c.l.b16 %v492
        %v1260 = vunpack.c.h.b16 %v492
        %v1261 = vunpack.c.l.b16 %v493
        %v1262 = vunpack.c.h.b16 %v493
        %v1263 = vunpack.c.l.b16 %v494
        %v1264 = vunpack.c.h.b16 %v494
        %v1265 = vunpack.c.l.b16 %v495
        %v1266 = vunpack.c.h.b16 %v495
        %v1267 = vunpack.c.l.b16 %v496
        %v1268 = vunpack.c.h.b16 %v496
        %v1269 = vunpack.c.l.b16 %v497
        %v1270 = vunpack.c.h.b16 %v497
        %v1271 = vunpack.c.l.b16 %v498
        %v1272 = vunpack.c.h.b16 %v498
        %v1273 = vunpack.c.l.b16 %v499
        %v1274 = vunpack.c.h.b16 %v499
        %v1275 = vunpack.c.l.b16 %v500
        %v1276 = vunpack.c.h.b16 %v500
        %v1277 = vunpack.c.l.b16 %v501
        %v1278 = vunpack.c.h.b16 %v501
        %v1279 = vunpack.c.l.b16 %v502
        %v1280 = vunpack.c.h.b16 %v502
        %v1281 = vunpack.c.l.b16 %v503
        %v1282 = vunpack.c.h.b16 %v503
        %v1283 = vunpack.c.l.b16 %v504
        %v1284 = vunpack.c.h.b16 %v504
        %v1285 = vunpack.c.l.b16 %v505
        %v1286 = vunpack.c.h.b16 %v505
        %v1287 = vunpack.c.l.b16 %v506
        %v1288 = vunpack.c.h.b16 %v506
        %v1289 = vunpack.c.l.b16 %v507
        %v1290 = vunpack.c.h.b16 %v507
        %v1291 = vunpack.c.l.b16 %v508
        %v1292 = vunpack.c.h.b16 %v508
        %v1293 = vunpack.c.l.b16 %v509
        %v1294 = vunpack.c.h.b16 %v509
        %v1295 = vunpack.c.l.b16 %v510
        %v1296 = vunpack.c.h.b16 %v510
        %v1297 = vunpack.c.l.b16 %v511
        %v1298 = vunpack.c.h.b16 %v511
        %v1299 = vunpack.c.l.b16 %v512
        %v1300 = vunpack.c.h.b16 %v512
        %v1301 = vunpack.c.l.b16 %v513
        %v1302 = vunpack.c.h.b16 %v513
        %v1303 = vunpack.c.l.b16 %v514
        %v1304 = vunpack.c.h.b16 %v514
        %v1305 = vunpack.c.l.b16 %v515
        %v1306 = vunpack.c.h.b16 %v515
        %v1307 = vunpack.c.l.b16 %v516
        %v1308 = vunpack.c.h.b16 %v516
        %v1309 = vunpack.c.l.b16 %v517
        %v1310 = vunpack.c.h.b16 %v517
        %v1311 = vunpack.c.l.b16 %v518
        %v1312 = vunpack.c.h.b16 %v518
        %v1313 = vunpack.c.l.b16 %v519
        %v1314 = vunpack.c.h.b16 %v519
        %v1315 = vunpack.c.l.b16 %v520
        %v1316 = vunpack.c.h.b16 %v520
        %v1317 = vunpack.c.l.b16 %v521
        %v1318 = vunpack.c.h.b16 %v521
        %v1319 = vunpack.c.l.b16 %v522
        %v1320 = vunpack.c.h.b16 %v522
        %v1321 = vunpack.c.l.b16 %v523
        %v1322 = vunpack.c.h.b16 %v523
        %v1323 = vunpack.c.l.b16 %v524
        %v1324 = vunpack.c.h.b16 %v524
        %v1325 = vunpack.c.l.b16 %v525
        %v1326 = vunpack.c.h.b16 %v525
        %v1327 = vunpack.c.l.b16 %v526
        %v1328 = vunpack.c.h.b16 %v526
        %v1329 = vunpack.c.l.b16 %v527
        %v1330 = vunpack.c.h.b16 %v527
        %v1331 = vunpack.c.l.b16 %v528
        %v1332 = vunpack.c.h.b16 %v528
        %v1333 = vunpack.c.l.b16 %v529
        %v1334 = vunpack.c.h.b16 %v529
        %v1335 = vunpack.c.l.b16 %v530
        %v1336 = vunpack.c.h.b16 %v530
        %v1337 = vunpack.c.l.b16 %v531
        %v1338 = vunpack.c.h.b16 %v531
        %v1339 = vunpack.c.l.b16 %v532
        %v1340 = vunpack.c.h.b16 %v532
        %v1341 = vpack.c.b16 %v833, %v829
        %v1342 = vpack.c.b16 %v834, %v830
        %v1343 = vpack.c.b16 %v835, %v831
        %v1344 = vpack.c.b16 %v836, %v832
        %v1345 = vpack.c.b16 %v841, %v837
        %v1346 = vpack.c.b16 %v842, %v838
        %v1347 = vpack.c.b16 %v843, %v839
        %v1348 = vpack.c.b16 %v844, %v840
        %v1349 = vpack.c.b16 %v849, %v845
        %v1350 = vpack.c.b16 %v850, %v846
        %v1351 = vpack.c.b16 %v851, %v847
        %v1352 = vpack.c.b16 %v852, %v848
        %v1353 = vpack.c.b16 %v857, %v853
        %v1354 = vpack.c.b16 %v858, %v854
        %v1355 = vpack.c.b16 %v859, %v855
        %v1356 = vpack.c.b16 %v860, %v856
        %v1357 = vpack.c.b16 %v865, %v861
        %v1358 = vpack.c.b16 %v866, %v862
        %v1359 = vpack.c.b16 %v867, %v863
        %v1360 = vpack.c.b16 %v868, %v864
        %v1361 = vpack.c.b16 %v873, %v869
        %v1362 = vpack.c.b16 %v874, %v870
        %v1363 = vpack.c.b16 %v875, %v871
        %v1364 = vpack.c.b16 %v876, %v872
        %v1365 = vpack.c.b16 %v881, %v877
        %v1366 = vpack.c.b16 %v882, %v878
        %v1367 = vpack.c.b16 %v883, %v879
        %v1368 = vpack.c.b16 %v884, %v880
        %v1369 = vpack.c.b16 %v889, %v885
        %v1370 = vpack.c.b16 %v890, %v886
        %v1371 = vpack.c.b16 %v891, %v887
        %v1372 = vpack.c.b16 %v892, %v888
        %v1373 = vpack.c.b16 %v897, %v893
        %v1374 = vpack.c.b16 %v898, %v894
        %v1375 = vpack.c.b16 %v899, %v895
        %v1376 = vpack.c.b16 %v900, %v896
        %v1377 = vpack.c.b16 %v905, %v901
        %v1378 = vpack.c.b16 %v906, %v902
        %v1379 = vpack.c.b16 %v907, %v903
        %v1380 = vpack.c.b16 %v908, %v904
        %v1381 = vpack.c.b16 %v913, %v909
        %v1382 = vpack.c.b16 %v914, %v910
        %v1383 = vpack.c.b16 %v915, %v911
        %v1384 = vpack.c.b16 %v916, %v912
        %v1385 = vpack.c.b16 %v921, %v917
        %v1386 = vpack.c.b16 %v922, %v918
        %v1387 = vpack.c.b16 %v923, %v919
        %v1388 = vpack.c.b16 %v924, %v920
        %v1389 = vpack.c.b16 %v929, %v925
        %v1390 = vpack.c.b16 %v930, %v926
        %v1391 = vpack.c.b16 %v931, %v927
        %v1392 = vpack.c.b16 %v932, %v928
        %v1393 = vpack.c.b16 %v937, %v933
        %v1394 = vpack.c.b16 %v938, %v934
        %v1395 = vpack.c.b16 %v939, %v935
        %v1396 = vpack.c.b16 %v940, %v936
        %v1397 = vpack.c.b16 %v945, %v941
        %v1398 = vpack.c.b16 %v946, %v942
        %v1399 = vpack.c.b16 %v947, %v943
        %v1400 = vpack.c.b16 %v948, %v944
        %v1401 = vpack.c.b16 %v953, %v949
        %v1402 = vpack.c.b16 %v954, %v950
        %v1403 = vpack.c.b16 %v955, %v951
        %v1404 = vpack.c.b16 %v956, %v952
        %v1405 = vpack.c.b16 %v961, %v957
        %v1406 = vpack.c.b16 %v962, %v958
        %v1407 = vpack.c.b16 %v963, %v959
        %v1408 = vpack.c.b16 %v964, %v960
        %v1409 = vpack.c.b16 %v969, %v965
        %v1410 = vpack.c.b16 %v970, %v966
        %v1411 = vpack.c.b16 %v971, %v967
        %v1412 = vpack.c.b16 %v972, %v968
        %v1413 = vpack.c.b16 %v977, %v973
        %v1414 = vpack.c.b16 %v978, %v974
        %v1415 = vpack.c.b16 %v979, %v975
        %v1416 = vpack.c.b16 %v980, %v976
        %v1417 = vpack.c.b16 %v985, %v981
        %v1418 = vpack.c.b16 %v986, %v982
        %v1419 = vpack.c.b16 %v987, %v983
        %v1420 = vpack.c.b16 %v988, %v984
        %v1421 = vpack.c.b16 %v993, %v989
        %v1422 = vpack.c.b16 %v994, %v990
        %v1423 = vpack.c.b16 %v995, %v991
        %v1424 = vpack.c.b16 %v996, %v992
        %v1425 = vpack.c.b16 %v1001, %v997
        %v1426 = vpack.c.b16 %v1002, %v998
        %v1427 = vpack.c.b16 %v1003, %v999
        %v1428 = vpack.c.b16 %v1004, %v1000
        %v1429 = vpack.c.b16 %v1009, %v1005
        %v1430 = vpack.c.b16 %v1010, %v1006
        %v1431 = vpack.c.b16 %v1011, %v1007
        %v1432 = vpack.c.b16 %v1012, %v1008
        %v1433 = vpack.c.b16 %v1017, %v1013
        %v1434 = vpack.c.b16 %v1018, %v1014
        %v1435 = vpack.c.b16 %v1019, %v1015
        %v1436 = vpack.c.b16 %v1020, %v1016
        %v1437 = vpack.c.b16 %v1025, %v1021
        %v1438 = vpack.c.b16 %v1026, %v1022
        %v1439 = vpack.c.b16 %v1027, %v1023
        %v1440 = vpack.c.b16 %v1028, %v1024
        %v1441 = vpack.c.b16 %v1033, %v1029
        %v1442 = vpack.c.b16 %v1034, %v1030
        %v1443 = vpack.c.b16 %v1035, %v1031
        %v1444 = vpack.c.b16 %v1036, %v1032
        %v1445 = vpack.c.b16 %v1041, %v1037
        %v1446 = vpack.c.b16 %v1042, %v1038
        %v1447 = vpack.c.b16 %v1043, %v1039
        %v1448 = vpack.c.b16 %v1044, %v1040
        %v1449 = vpack.c.b16 %v1049, %v1045
        %v1450 = vpack.c.b16 %v1050, %v1046
        %v1451 = vpack.c.b16 %v1051, %v1047
        %v1452 = vpack.c.b16 %v1052, %v1048
        %v1453 = vpack.c.b16 %v1057, %v1053
        %v1454 = vpack.c.b16 %v1058, %v1054
        %v1455 = vpack.c.b16 %v1059, %v1055
        %v1456 = vpack.c.b16 %v1060, %v1056
        %v1457 = vpack.c.b16 %v1065, %v1061
        %v1458 = vpack.c.b16 %v1066, %v1062
        %v1459 = vpack.c.b16 %v1067, %v1063
        %v1460 = vpack.c.b16 %v1068, %v1064
        %v1461 = vpack.c.b16 %v1073, %v1069
        %v1462 = vpack.c.b16 %v1074, %v1070
        %v1463 = vpack.c.b16 %v1075, %v1071
        %v1464 = vpack.c.b16 %v1076, %v1072
        %v1465 = vpack.c.b16 %v1081, %v1077
        %v1466 = vpack.c.b16 %v1082, %v1078
        %v1467 = vpack.c.b16 %v1083, %v1079
        %v1468 = vpack.c.b16 %v1084, %v1080
        %v1469 = vpack.c.b16 %v1089, %v1085
        %v1470 = vpack.c.b16 %v1090, %v1086
        %v1471 = vpack.c.b16 %v1091, %v1087
        %v1472 = vpack.c.b16 %v1092, %v1088
        %v1473 = vpack.c.b16 %v1097, %v1093
        %v1474 = vpack.c.b16 %v1098, %v1094
        %v1475 = vpack.c.b16 %v1099, %v1095
        %v1476 = vpack.c.b16 %v1100, %v1096
        %v1477 = vpack.c.b16 %v1105, %v1101
        %v1478 = vpack.c.b16 %v1106, %v1102
        %v1479 = vpack.c.b16 %v1107, %v1103
        %v1480 = vpack.c.b16 %v1108, %v1104
        %v1481 = vpack.c.b16 %v1113, %v1109
        %v1482 = vpack.c.b16 %v1114, %v1110
        %v1483 = vpack.c.b16 %v1115, %v1111
        %v1484 = vpack.c.b16 %v1116, %v1112
        %v1485 = vpack.c.b16 %v1121, %v1117
        %v1486 = vpack.c.b16 %v1122, %v1118
        %v1487 = vpack.c.b16 %v1123, %v1119
        %v1488 = vpack.c.b16 %v1124, %v1120
        %v1489 = vpack.c.b16 %v1129, %v1125
        %v1490 = vpack.c.b16 %v1130, %v1126
        %v1491 = vpack.c.b16 %v1131, %v1127
        %v1492 = vpack.c.b16 %v1132, %v1128
        %v1493 = vpack.c.b16 %v1137, %v1133
        %v1494 = vpack.c.b16 %v1138, %v1134
        %v1495 = vpack.c.b16 %v1139, %v1135
        %v1496 = vpack.c.b16 %v1140, %v1136
        %v1497 = vpack.c.b16 %v1145, %v1141
        %v1498 = vpack.c.b16 %v1146, %v1142
        %v1499 = vpack.c.b16 %v1147, %v1143
        %v1500 = vpack.c.b16 %v1148, %v1144
        %v1501 = vpack.c.b16 %v1153, %v1149
        %v1502 = vpack.c.b16 %v1154, %v1150
        %v1503 = vpack.c.b16 %v1155, %v1151
        %v1504 = vpack.c.b16 %v1156, %v1152
        %v1505 = vpack.c.b16 %v1161, %v1157
        %v1506 = vpack.c.b16 %v1162, %v1158
        %v1507 = vpack.c.b16 %v1163, %v1159
        %v1508 = vpack.c.b16 %v1164, %v1160
        %v1509 = vpack.c.b16 %v1169, %v1165
        %v1510 = vpack.c.b16 %v1170, %v1166
        %v1511 = vpack.c.b16 %v1171, %v1167
        %v1512 = vpack.c.b16 %v1172, %v1168
        %v1513 = vpack.c.b16 %v1177, %v1173
        %v1514 = vpack.c.b16 %v1178, %v1174
        %v1515 = vpack.c.b16 %v1179, %v1175
        %v1516 = vpack.c.b16 %v1180, %v1176
        %v1517 = vpack.c.b16 %v1185, %v1181
        %v1518 = vpack.c.b16 %v1186, %v1182
        %v1519 = vpack.c.b16 %v1187, %v1183
        %v1520 = vpack.c.b16 %v1188, %v1184
        %v1521 = vpack.c.b16 %v1193, %v1189
        %v1522 = vpack.c.b16 %v1194, %v1190
        %v1523 = vpack.c.b16 %v1195, %v1191
        %v1524 = vpack.c.b16 %v1196, %v1192
        %v1525 = vpack.c.b16 %v1201, %v1197
        %v1526 = vpack.c.b16 %v1202, %v1198
        %v1527 = vpack.c.b16 %v1203, %v1199
        %v1528 = vpack.c.b16 %v1204, %v1200
        %v1529 = vpack.c.b16 %v1209, %v1205
        %v1530 = vpack.c.b16 %v1210, %v1206
        %v1531 = vpack.c.b16 %v1211, %v1207
        %v1532 = vpack.c.b16 %v1212, %v1208
        %v1533 = vpack.c.b16 %v1217, %v1213
        %v1534 = vpack.c.b16 %v1218, %v1214
        %v1535 = vpack.c.b16 %v1219, %v1215
        %v1536 = vpack.c.b16 %v1220, %v1216
        %v1537 = vpack.c.b16 %v1225, %v1221
        %v1538 = vpack.c.b16 %v1226, %v1222
        %v1539 = vpack.c.b16 %v1227, %v1223
        %v1540 = vpack.c.b16 %v1228, %v1224
        %v1541 = vpack.c.b16 %v1233, %v1229
        %v1542 = vpack.c.b16 %v1234, %v1230
        %v1543 = vpack.c.b16 %v1235, %v1231
        %v1544 = vpack.c.b16 %v1236, %v1232
        %v1545 = vpack.c.b16 %v1241, %v1237
        %v1546 = vpack.c.b16 %v1242, %v1238
        %v1547 = vpack.c.b16 %v1243, %v1239
        %v1548 = vpack.c.b16 %v1244, %v1240
        %v1549 = vpack.c.b16 %v1249, %v1245
        %v1550 = vpack.c.b16 %v1250, %v1246
        %v1551 = vpack.c.b16 %v1251, %v1247
        %v1552 = vpack.c.b16 %v1252, %v1248
        %v1553 = vpack.c.b16 %v1257, %v1253
        %v1554 = vpack.c.b16 %v1258, %v1254
        %v1555 = vpack.c.b16 %v1259, %v1255
        %v1556 = vpack.c.b16 %v1260, %v1256
        %v1557 = vpack.c.b16 %v1265, %v1261
        %v1558 = vpack.c.b16 %v1266, %v1262
        %v1559 = vpack.c.b16 %v1267, %v1263
        %v1560 = vpack.c.b16 %v1268, %v1264
        %v1561 = vpack.c.b16 %v1273, %v1269
        %v1562 = vpack.c.b16 %v1274, %v1270
        %v1563 = vpack.c.b16 %v1275, %v1271
        %v1564 = vpack.c.b16 %v1276, %v1272
        %v1565 = vpack.c.b16 %v1281, %v1277
        %v1566 = vpack.c.b16 %v1282, %v1278
        %v1567 = vpack.c.b16 %v1283, %v1279
        %v1568 = vpack.c.b16 %v1284, %v1280
        %v1569 = vpack.c.b16 %v1289, %v1285
        %v1570 = vpack.c.b16 %v1290, %v1286
        %v1571 = vpack.c.b16 %v1291, %v1287
        %v1572 = vpack.c.b16 %v1292, %v1288
        %v1573 = vpack.c.b16 %v1297, %v1293
        %v1574 = vpack.c.b16 %v1298, %v1294
        %v1575 = vpack.c.b16 %v1299, %v1295
        %v1576 = vpack.c.b16 %v1300, %v1296
        %v1577 = vpack.c.b16 %v1305, %v1301
        %v1578 = vpack.c.b16 %v1306, %v1302
        %v1579 = vpack.c.b16 %v1307, %v1303
        %v1580 = vpack.c.b16 %v1308, %v1304
        %v1581 = vpack.c.b16 %v1313, %v1309
        %v1582 = vpack.c.b16 %v1314, %v1310
        %v1583 = vpack.c.b16 %v1315, %v1311
        %v1584 = vpack.c.b16 %v1316, %v1312
        %v1585 = vpack.c.b16 %v1321, %v1317
        %v1586 = vpack.c.b16 %v1322, %v1318
        %v1587 = vpack.c.b16 %v1323, %v1319
        %v1588 = vpack.c.b16 %v1324, %v1320
        %v1589 = vpack.c.b16 %v1329, %v1325
        %v1590 = vpack.c.b16 %v1330, %v1326
        %v1591 = vpack.c.b16 %v1331, %v1327
        %v1592 = vpack.c.b16 %v1332, %v1328
        %v1593 = vpack.c.b16 %v1337, %v1333
        %v1594 = vpack.c.b16 %v1338, %v1334
        %v1595 = vpack.c.b16 %v1339, %v1335
        %v1596 = vpack.c.b16 %v1340, %v1336
        %1853 = vmatprep.subr.bf16.mxu0 %v1342
        %1854 = vmatpush1.bf16.msra.mxu0 %v1341
        %1855 = vmatprep.subr.bf16.mxu0 %v1346
        %1856 = vmatpush1.bf16.msra.mxu0 %v1345
        %1857 = vmatprep.subr.bf16.mxu0 %v1350
        %1858 = vmatpush1.bf16.msra.mxu0 %v1349
        %1859 = vmatprep.subr.bf16.mxu0 %v1354
        %1860 = vmatpush1.bf16.msra.mxu0 %v1353
        %1861 = vmatprep.subr.bf16.mxu0 %v1358
        %1862 = vmatpush1.bf16.msra.mxu0 %v1357
        %1863 = vmatprep.subr.bf16.mxu0 %v1362
        %1864 = vmatpush1.bf16.msra.mxu0 %v1361
        %1865 = vmatprep.subr.bf16.mxu0 %v1366
        %1866 = vmatpush1.bf16.msra.mxu0 %v1365
        %1867 = vmatprep.subr.bf16.mxu0 %v1370
        %1868 = vmatpush1.bf16.msra.mxu0 %v1369
        %1869 = vmatprep.subr.bf16.mxu0 %v1374
        %1870 = vmatpush1.bf16.msra.mxu0 %v1373
        %1871 = vmatprep.subr.bf16.mxu0 %v1378
        %1872 = vmatpush1.bf16.msra.mxu0 %v1377
        %1873 = vmatprep.subr.bf16.mxu0 %v1382
        %1874 = vmatpush1.bf16.msra.mxu0 %v1381
        %1875 = vmatprep.subr.bf16.mxu0 %v1386
        %1876 = vmatpush1.bf16.msra.mxu0 %v1385
        %1877 = vmatprep.subr.bf16.mxu0 %v1390
        %1878 = vmatpush1.bf16.msra.mxu0 %v1389
        %1879 = vmatprep.subr.bf16.mxu0 %v1394
        %1880 = vmatpush1.bf16.msra.mxu0 %v1393
        %1881 = vmatprep.subr.bf16.mxu0 %v1398
        %1882 = vmatpush1.bf16.msra.mxu0 %v1397
        %1883 = vmatprep.subr.bf16.mxu0 %v1402
        %1884 = vmatpush1.bf16.msra.mxu0 %v1401
        %1885 = vmatprep.mubr.bf16.mxu0 %v558
        %1886 = vmatmul.mubr.bf16.gmra.mrb[0].mxu0 %v557
        %v1887 = vpop.f32.mrb[0].mxu0
        %v1888 = vadd.f32 0.0, %v1887
        %v1889 = vpop.f32.mrb[0].mxu0
        %v1890 = vadd.f32 0.0, %v1889
        %v1891 = vpop.f32.mrb[0].mxu0
        %v1892 = vadd.f32 0.0, %v1891
        %v1893 = vpop.f32.mrb[0].mxu0
        %v1894 = vadd.f32 0.0, %v1893
        %1895 = vdwg.mxu0
        %1896 = vmatprep.subr.bf16.mxu0 %v1406
        %1897 = vmatpush1.bf16.msra.mxu0 %v1405
        %1898 = vmatprep.subr.bf16.mxu0 %v1410
        %1899 = vmatpush1.bf16.msra.mxu0 %v1409
        %1900 = vmatprep.subr.bf16.mxu0 %v1414
        %1901 = vmatpush1.bf16.msra.mxu0 %v1413
        %1902 = vmatprep.subr.bf16.mxu0 %v1418
        %1903 = vmatpush1.bf16.msra.mxu0 %v1417
        %1904 = vmatprep.subr.bf16.mxu0 %v1422
        %1905 = vmatpush1.bf16.msra.mxu0 %v1421
        %1906 = vmatprep.subr.bf16.mxu0 %v1426
        %1907 = vmatpush1.bf16.msra.mxu0 %v1425
        %1908 = vmatprep.subr.bf16.mxu0 %v1430
        %1909 = vmatpush1.bf16.msra.mxu0 %v1429
        %1910 = vmatprep.subr.bf16.mxu0 %v1434
        %1911 = vmatpush1.bf16.msra.mxu0 %v1433
        %1912 = vmatprep.subr.bf16.mxu0 %v1438
        %1913 = vmatpush1.bf16.msra.mxu0 %v1437
        %1914 = vmatprep.subr.bf16.mxu0 %v1442
        %1915 = vmatpush1.bf16.msra.mxu0 %v1441
        %1916 = vmatprep.subr.bf16.mxu0 %v1446
        %1917 = vmatpush1.bf16.msra.mxu0 %v1445
        %1918 = vmatprep.subr.bf16.mxu0 %v1450
        %1919 = vmatpush1.bf16.msra.mxu0 %v1449
        %1920 = vmatprep.subr.bf16.mxu0 %v1454
        %1921 = vmatpush1.bf16.msra.mxu0 %v1453
        %1922 = vmatprep.subr.bf16.mxu0 %v1458
        %1923 = vmatpush1.bf16.msra.mxu0 %v1457
        %1924 = vmatprep.subr.bf16.mxu0 %v1462
        %1925 = vmatpush1.bf16.msra.mxu0 %v1461
        %1926 = vmatprep.subr.bf16.mxu0 %v1466
        %1927 = vmatpush1.bf16.msra.mxu0 %v1465
        %1928 = vmatprep.mubr.bf16.mxu0 %v560
        %1929 = vmatmul.mubr.bf16.gmra.mrb[0].mxu0 %v559
        %v1930 = vpop.f32.mrb[0].mxu0
        %v1931 = vadd.f32 %v1888, %v1930
        %v1932 = vpop.f32.mrb[0].mxu0
        %v1933 = vadd.f32 %v1890, %v1932
        %v1934 = vpop.f32.mrb[0].mxu0
        %v1935 = vadd.f32 %v1892, %v1934
        %v1936 = vpop.f32.mrb[0].mxu0
        %v1937 = vadd.f32 %v1894, %v1936
        %1938 = vdwg.mxu0
        %1939 = vmatprep.subr.bf16.mxu0 %v1470
        %1940 = vmatpush1.bf16.msra.mxu0 %v1469
        %1941 = vmatprep.subr.bf16.mxu0 %v1474
        %1942 = vmatpush1.bf16.msra.mxu0 %v1473
        %1943 = vmatprep.subr.bf16.mxu0 %v1478
        %1944 = vmatpush1.bf16.msra.mxu0 %v1477
        %1945 = vmatprep.subr.bf16.mxu0 %v1482
        %1946 = vmatpush1.bf16.msra.mxu0 %v1481
        %1947 = vmatprep.subr.bf16.mxu0 %v1486
        %1948 = vmatpush1.bf16.msra.mxu0 %v1485
        %1949 = vmatprep.subr.bf16.mxu0 %v1490
        %1950 = vmatpush1.bf16.msra.mxu0 %v1489
        %1951 = vmatprep.subr.bf16.mxu0 %v1494
        %1952 = vmatpush1.bf16.msra.mxu0 %v1493
        %1953 = vmatprep.subr.bf16.mxu0 %v1498
        %1954 = vmatpush1.bf16.msra.mxu0 %v1497
        %1955 = vmatprep.subr.bf16.mxu0 %v1502
        %1956 = vmatpush1.bf16.msra.mxu0 %v1501
        %1957 = vmatprep.subr.bf16.mxu0 %v1506
        %1958 = vmatpush1.bf16.msra.mxu0 %v1505
        %1959 = vmatprep.subr.bf16.mxu0 %v1510
        %1960 = vmatpush1.bf16.msra.mxu0 %v1509
        %1961 = vmatprep.subr.bf16.mxu0 %v1514
        %1962 = vmatpush1.bf16.msra.mxu0 %v1513
        %1963 = vmatprep.subr.bf16.mxu0 %v1518
        %1964 = vmatpush1.bf16.msra.mxu0 %v1517
        %1965 = vmatprep.subr.bf16.mxu0 %v1522
        %1966 = vmatpush1.bf16.msra.mxu0 %v1521
        %1967 = vmatprep.subr.bf16.mxu0 %v1526
        %1968 = vmatpush1.bf16.msra.mxu0 %v1525
        %1969 = vmatprep.subr.bf16.mxu0 %v1530
        %1970 = vmatpush1.bf16.msra.mxu0 %v1529
        %1971 = vmatprep.mubr.bf16.mxu0 %v562
        %1972 = vmatmul.mubr.bf16.gmra.mrb[0].mxu0 %v561
        %v1973 = vpop.f32.mrb[0].mxu0
        %v1974 = vadd.f32 %v1931, %v1973
        %v1975 = vpop.f32.mrb[0].mxu0
        %v1976 = vadd.f32 %v1933, %v1975
        %v1977 = vpop.f32.mrb[0].mxu0
        %v1978 = vadd.f32 %v1935, %v1977
        %v1979 = vpop.f32.mrb[0].mxu0
        %v1980 = vadd.f32 %v1937, %v1979
        %1981 = vdwg.mxu0
        %1982 = vmatprep.subr.bf16.mxu0 %v1534
        %1983 = vmatpush1.bf16.msra.mxu0 %v1533
        %1984 = vmatprep.subr.bf16.mxu0 %v1538
        %1985 = vmatpush1.bf16.msra.mxu0 %v1537
        %1986 = vmatprep.subr.bf16.mxu0 %v1542
        %1987 = vmatpush1.bf16.msra.mxu0 %v1541
        %1988 = vmatprep.subr.bf16.mxu0 %v1546
        %1989 = vmatpush1.bf16.msra.mxu0 %v1545
        %1990 = vmatprep.subr.bf16.mxu0 %v1550
        %1991 = vmatpush1.bf16.msra.mxu0 %v1549
        %1992 = vmatprep.subr.bf16.mxu0 %v1554
        %1993 = vmatpush1.bf16.msra.mxu0 %v1553
        %1994 = vmatprep.subr.bf16.mxu0 %v1558
        %1995 = vmatpush1.bf16.msra.mxu0 %v1557
        %1996 = vmatprep.subr.bf16.mxu0 %v1562
        %1997 = vmatpush1.bf16.msra.mxu0 %v1561
        %1998 = vmatprep.subr.bf16.mxu0 %v1566
        %1999 = vmatpush1.bf16.msra.mxu0 %v1565
        %2000 = vmatprep.subr.bf16.mxu0 %v1570
        %2001 = vmatpush1.bf16.msra.mxu0 %v1569
        %2002 = vmatprep.subr.bf16.mxu0 %v1574
        %2003 = vmatpush1.bf16.msra.mxu0 %v1573
        %2004 = vmatprep.subr.bf16.mxu0 %v1578
        %2005 = vmatpush1.bf16.msra.mxu0 %v1577
        %2006 = vmatprep.subr.bf16.mxu0 %v1582
        %2007 = vmatpush1.bf16.msra.mxu0 %v1581
        %2008 = vmatprep.subr.bf16.mxu0 %v1586
        %2009 = vmatpush1.bf16.msra.mxu0 %v1585
        %2010 = vmatprep.subr.bf16.mxu0 %v1590
        %2011 = vmatpush1.bf16.msra.mxu0 %v1589
        %2012 = vmatprep.subr.bf16.mxu0 %v1594
        %2013 = vmatpush1.bf16.msra.mxu0 %v1593
        %2014 = vmatprep.mubr.bf16.mxu0 %v564
        %2015 = vmatmul.mubr.bf16.gmra.mrb[0].mxu0 %v563
        %v2016 = vpop.f32.mrb[0].mxu0
        %v2017 = vadd.f32 %v1974, %v2016
        %v2018 = vpop.f32.mrb[0].mxu0
        %v2019 = vadd.f32 %v1976, %v2018
        %v2020 = vpop.f32.mrb[0].mxu0
        %v2021 = vadd.f32 %v1978, %v2020
        %v2022 = vpop.f32.mrb[0].mxu0
        %v2023 = vadd.f32 %v1980, %v2022
        %2024 = vdwg.mxu0
        %2025 = vmatprep.subr.bf16.mxu0 %v1344
        %2026 = vmatpush1.bf16.msra.mxu0 %v1343
        %2027 = vmatprep.subr.bf16.mxu0 %v1348
        %2028 = vmatpush1.bf16.msra.mxu0 %v1347
        %2029 = vmatprep.subr.bf16.mxu0 %v1352
        %2030 = vmatpush1.bf16.msra.mxu0 %v1351
        %2031 = vmatprep.subr.bf16.mxu0 %v1356
        %2032 = vmatpush1.bf16.msra.mxu0 %v1355
        %2033 = vmatprep.subr.bf16.mxu0 %v1360
        %2034 = vmatpush1.bf16.msra.mxu0 %v1359
        %2035 = vmatprep.subr.bf16.mxu0 %v1364
        %2036 = vmatpush1.bf16.msra.mxu0 %v1363
        %2037 = vmatprep.subr.bf16.mxu0 %v1368
        %2038 = vmatpush1.bf16.msra.mxu0 %v1367
        %2039 = vmatprep.subr.bf16.mxu0 %v1372
        %2040 = vmatpush1.bf16.msra.mxu0 %v1371
        %2041 = vmatprep.subr.bf16.mxu0 %v1376
        %2042 = vmatpush1.bf16.msra.mxu0 %v1375
        %2043 = vmatprep.subr.bf16.mxu0 %v1380
        %2044 = vmatpush1.bf16.msra.mxu0 %v1379
        %2045 = vmatprep.subr.bf16.mxu0 %v1384
        %2046 = vmatpush1.bf16.msra.mxu0 %v1383
        %2047 = vmatprep.subr.bf16.mxu0 %v1388
        %2048 = vmatpush1.bf16.msra.mxu0 %v1387
        %2049 = vmatprep.subr.bf16.mxu0 %v1392
        %2050 = vmatpush1.bf16.msra.mxu0 %v1391
        %2051 = vmatprep.subr.bf16.mxu0 %v1396
        %2052 = vmatpush1.bf16.msra.mxu0 %v1395
        %2053 = vmatprep.subr.bf16.mxu0 %v1400
        %2054 = vmatpush1.bf16.msra.mxu0 %v1399
        %2055 = vmatprep.subr.bf16.mxu0 %v1404
        %2056 = vmatpush1.bf16.msra.mxu0 %v1403
        %2057 = vmatprep.mubr.bf16.mxu0 %v558
        %2058 = vmatmul.mubr.bf16.gmra.mrb[0].mxu0 %v557
        %v2059 = vpop.f32.mrb[0].mxu0
        %v2060 = vadd.f32 0.0, %v2059
        %v2061 = vpop.f32.mrb[0].mxu0
        %v2062 = vadd.f32 0.0, %v2061
        %v2063 = vpop.f32.mrb[0].mxu0
        %v2064 = vadd.f32 0.0, %v2063
        %v2065 = vpop.f32.mrb[0].mxu0
        %v2066 = vadd.f32 0.0, %v2065
        %2067 = vdwg.mxu0
        %2068 = vmatprep.subr.bf16.mxu0 %v1408
        %2069 = vmatpush1.bf16.msra.mxu0 %v1407
        %2070 = vmatprep.subr.bf16.mxu0 %v1412
        %2071 = vmatpush1.bf16.msra.mxu0 %v1411
        %2072 = vmatprep.subr.bf16.mxu0 %v1416
        %2073 = vmatpush1.bf16.msra.mxu0 %v1415
        %2074 = vmatprep.subr.bf16.mxu0 %v1420
        %2075 = vmatpush1.bf16.msra.mxu0 %v1419
        %2076 = vmatprep.subr.bf16.mxu0 %v1424
        %2077 = vmatpush1.bf16.msra.mxu0 %v1423
        %2078 = vmatprep.subr.bf16.mxu0 %v1428
        %2079 = vmatpush1.bf16.msra.mxu0 %v1427
        %2080 = vmatprep.subr.bf16.mxu0 %v1432
        %2081 = vmatpush1.bf16.msra.mxu0 %v1431
        %2082 = vmatprep.subr.bf16.mxu0 %v1436
        %2083 = vmatpush1.bf16.msra.mxu0 %v1435
        %2084 = vmatprep.subr.bf16.mxu0 %v1440
        %2085 = vmatpush1.bf16.msra.mxu0 %v1439
        %2086 = vmatprep.subr.bf16.mxu0 %v1444
        %2087 = vmatpush1.bf16.msra.mxu0 %v1443
        %2088 = vmatprep.subr.bf16.mxu0 %v1448
        %2089 = vmatpush1.bf16.msra.mxu0 %v1447
        %2090 = vmatprep.subr.bf16.mxu0 %v1452
        %2091 = vmatpush1.bf16.msra.mxu0 %v1451
        %2092 = vmatprep.subr.bf16.mxu0 %v1456
        %2093 = vmatpush1.bf16.msra.mxu0 %v1455
        %2094 = vmatprep.subr.bf16.mxu0 %v1460
        %2095 = vmatpush1.bf16.msra.mxu0 %v1459
        %2096 = vmatprep.subr.bf16.mxu0 %v1464
        %2097 = vmatpush1.bf16.msra.mxu0 %v1463
        %2098 = vmatprep.subr.bf16.mxu0 %v1468
        %2099 = vmatpush1.bf16.msra.mxu0 %v1467
        %2100 = vmatprep.mubr.bf16.mxu0 %v560
        %2101 = vmatmul.mubr.bf16.gmra.mrb[0].mxu0 %v559
        %v2102 = vpop.f32.mrb[0].mxu0
        %v2103 = vadd.f32 %v2060, %v2102
        %v2104 = vpop.f32.mrb[0].mxu0
        %v2105 = vadd.f32 %v2062, %v2104
        %v2106 = vpop.f32.mrb[0].mxu0
        %v2107 = vadd.f32 %v2064, %v2106
        %v2108 = vpop.f32.mrb[0].mxu0
        %v2109 = vadd.f32 %v2066, %v2108
        %2110 = vdwg.mxu0
        %2111 = vmatprep.subr.bf16.mxu0 %v1472
        %2112 = vmatpush1.bf16.msra.mxu0 %v1471
        %2113 = vmatprep.subr.bf16.mxu0 %v1476
        %2114 = vmatpush1.bf16.msra.mxu0 %v1475
        %2115 = vmatprep.subr.bf16.mxu0 %v1480
        %2116 = vmatpush1.bf16.msra.mxu0 %v1479
        %2117 = vmatprep.subr.bf16.mxu0 %v1484
        %2118 = vmatpush1.bf16.msra.mxu0 %v1483
        %2119 = vmatprep.subr.bf16.mxu0 %v1488
        %2120 = vmatpush1.bf16.msra.mxu0 %v1487
        %2121 = vmatprep.subr.bf16.mxu0 %v1492
        %2122 = vmatpush1.bf16.msra.mxu0 %v1491
        %2123 = vmatprep.subr.bf16.mxu0 %v1496
        %2124 = vmatpush1.bf16.msra.mxu0 %v1495
        %2125 = vmatprep.subr.bf16.mxu0 %v1500
        %2126 = vmatpush1.bf16.msra.mxu0 %v1499
        %2127 = vmatprep.subr.bf16.mxu0 %v1504
        %2128 = vmatpush1.bf16.msra.mxu0 %v1503
        %2129 = vmatprep.subr.bf16.mxu0 %v1508
        %2130 = vmatpush1.bf16.msra.mxu0 %v1507
        %2131 = vmatprep.subr.bf16.mxu0 %v1512
        %2132 = vmatpush1.bf16.msra.mxu0 %v1511
        %2133 = vmatprep.subr.bf16.mxu0 %v1516
        %2134 = vmatpush1.bf16.msra.mxu0 %v1515
        %2135 = vmatprep.subr.bf16.mxu0 %v1520
        %2136 = vmatpush1.bf16.msra.mxu0 %v1519
        %2137 = vmatprep.subr.bf16.mxu0 %v1524
        %2138 = vmatpush1.bf16.msra.mxu0 %v1523
        %2139 = vmatprep.subr.bf16.mxu0 %v1528
        %2140 = vmatpush1.bf16.msra.mxu0 %v1527
        %2141 = vmatprep.subr.bf16.mxu0 %v1532
        %2142 = vmatpush1.bf16.msra.mxu0 %v1531
        %2143 = vmatprep.mubr.bf16.mxu0 %v562
        %2144 = vmatmul.mubr.bf16.gmra.mrb[0].mxu0 %v561
        %v2145 = vpop.f32.mrb[0].mxu0
        %v2146 = vadd.f32 %v2103, %v2145
        %v2147 = vpop.f32.mrb[0].mxu0
        %v2148 = vadd.f32 %v2105, %v2147
        %v2149 = vpop.f32.mrb[0].mxu0
        %v2150 = vadd.f32 %v2107, %v2149
        %v2151 = vpop.f32.mrb[0].mxu0
        %v2152 = vadd.f32 %v2109, %v2151
        %2153 = vdwg.mxu0
        %2154 = vmatprep.subr.bf16.mxu0 %v1536
        %2155 = vmatpush1.bf16.msra.mxu0 %v1535
        %2156 = vmatprep.subr.bf16.mxu0 %v1540
        %2157 = vmatpush1.bf16.msra.mxu0 %v1539
        %2158 = vmatprep.subr.bf16.mxu0 %v1544
        %2159 = vmatpush1.bf16.msra.mxu0 %v1543
        %2160 = vmatprep.subr.bf16.mxu0 %v1548
        %2161 = vmatpush1.bf16.msra.mxu0 %v1547
        %2162 = vmatprep.subr.bf16.mxu0 %v1552
        %2163 = vmatpush1.bf16.msra.mxu0 %v1551
        %2164 = vmatprep.subr.bf16.mxu0 %v1556
        %2165 = vmatpush1.bf16.msra.mxu0 %v1555
        %2166 = vmatprep.subr.bf16.mxu0 %v1560
        %2167 = vmatpush1.bf16.msra.mxu0 %v1559
        %2168 = vmatprep.subr.bf16.mxu0 %v1564
        %2169 = vmatpush1.bf16.msra.mxu0 %v1563
        %2170 = vmatprep.subr.bf16.mxu0 %v1568
        %2171 = vmatpush1.bf16.msra.mxu0 %v1567
        %2172 = vmatprep.subr.bf16.mxu0 %v1572
        %2173 = vmatpush1.bf16.msra.mxu0 %v1571
        %2174 = vmatprep.subr.bf16.mxu0 %v1576
        %2175 = vmatpush1.bf16.msra.mxu0 %v1575
        %2176 = vmatprep.subr.bf16.mxu0 %v1580
        %2177 = vmatpush1.bf16.msra.mxu0 %v1579
        %2178 = vmatprep.subr.bf16.mxu0 %v1584
        %2179 = vmatpush1.bf16.msra.mxu0 %v1583
        %2180 = vmatprep.subr.bf16.mxu0 %v1588
        %2181 = vmatpush1.bf16.msra.mxu0 %v1587
        %2182 = vmatprep.subr.bf16.mxu0 %v1592
        %2183 = vmatpush1.bf16.msra.mxu0 %v1591
        %2184 = vmatprep.subr.bf16.mxu0 %v1596
        %2185 = vmatpush1.bf16.msra.mxu0 %v1595
        %2186 = vmatprep.mubr.bf16.mxu0 %v564
        %2187 = vmatmul.mubr.bf16.gmra.mrb[0].mxu0 %v563
        %v2188 = vpop.f32.mrb[0].mxu0
        %v2189 = vadd.f32 %v2146, %v2188
        %v2190 = vpop.f32.mrb[0].mxu0
        %v2191 = vadd.f32 %v2148, %v2190
        %v2192 = vpop.f32.mrb[0].mxu0
        %v2193 = vadd.f32 %v2150, %v2192
        %v2194 = vpop.f32.mrb[0].mxu0
        %v2195 = vadd.f32 %v2152, %v2194
        %2196 = vdwg.mxu0
        %p2197 = scmp.eq.s32.totalorder %s26, 0
        // Predicated region
        $region45: #{tpu_custom_call.1} parent=31 // pred_check
          %p2198 = pneg %p2197
        $region46: #{tpu_custom_call.1} parent=31 // pred_check_branch
          %2200 = sbr.rel (%p2198) target = $region48
        $region47: #{tpu_custom_call.1} parent=31 // pred_region
          %v2201 = vld [vmem:[%s236] sm:$0xf]
          %v2203 = vlaneseq
          %v2204 = vshrl.u32 %v2203, 7
          %v2205 = vsub.s32 0, %v2204
          %v2206 = vrot.slane %v2201, %v2205
          %v2207 = vlaneseq
          %v2208 = vshrl.u32 %v2207, 7
          %v2209 = vsub.s32 1, %v2208
          %v2210 = vrot.slane %v2201, %v2209
          %v2211 = vlaneseq
          %v2212 = vshrl.u32 %v2211, 7
          %v2213 = vsub.s32 2, %v2212
          %v2214 = vrot.slane %v2201, %v2213
          %v2215 = vlaneseq
          %v2216 = vshrl.u32 %v2215, 7
          %v2217 = vsub.s32 3, %v2216
          %v2218 = vrot.slane %v2201, %v2217
          %v2223 = vadd.f32 %v2017, %v2206
          %v2224 = vadd.f32 %v2019, %v2210
          %v2225 = vadd.f32 %v2189, %v2214
          %v2226 = vadd.f32 %v2191, %v2218
          %v2227 = vadd.f32 %v2021, %v2206
          %v2228 = vadd.f32 %v2023, %v2210
          %v2229 = vadd.f32 %v2193, %v2214
          %v2230 = vadd.f32 %v2195, %v2218
          %2231 = vst [vmem:[%s263] sm:$0xff] %v2223
          %2232 = vst [vmem:[%s263 + $0x8] sm:$0xff] %v2224
          %2233 = vst [vmem:[%s263 + $0x10] sm:$0xff] %v2225
          %2234 = vst [vmem:[%s263 + $0x18] sm:$0xff] %v2226
          %2235 = vst [vmem:[%s263 + $0x20] sm:$0xff] %v2227
          %2236 = vst [vmem:[%s263 + $0x28] sm:$0xff] %v2228
          %2237 = vst [vmem:[%s263 + $0x30] sm:$0xff] %v2229
          %2238 = vst [vmem:[%s263 + $0x38] sm:$0xff] %v2230
        $region48: #{tpu_custom_call.1} parent=31 // pred_fallthru
          _
        %p2239 = scmp.ne.s32.totalorder %s26, 0
        // Predicated region
        $region49: #{tpu_custom_call.1} parent=31 // pred_check
          %p2240 = pneg %p2239
        $region50: #{tpu_custom_call.1} parent=31 // pred_check_branch
          %2242 = sbr.rel (%p2240) target = $region52
        $region51: #{tpu_custom_call.1} parent=31 // pred_region
          %v2243 = vld [vmem:[%s263] sm:$0xff]
          %v2244 = vld [vmem:[%s263 + $0x8] sm:$0xff]
          %v2245 = vld [vmem:[%s263 + $0x10] sm:$0xff]
          %v2246 = vld [vmem:[%s263 + $0x18] sm:$0xff]
          %v2247 = vld [vmem:[%s263 + $0x20] sm:$0xff]
          %v2248 = vld [vmem:[%s263 + $0x28] sm:$0xff]
          %v2249 = vld [vmem:[%s263 + $0x30] sm:$0xff]
          %v2250 = vld [vmem:[%s263 + $0x38] sm:$0xff]
          %v2251 = vadd.f32 %v2243, %v2017
          %v2252 = vadd.f32 %v2244, %v2019
          %v2253 = vadd.f32 %v2245, %v2189
          %v2254 = vadd.f32 %v2246, %v2191
          %v2255 = vadd.f32 %v2247, %v2021
          %v2256 = vadd.f32 %v2248, %v2023
          %v2257 = vadd.f32 %v2249, %v2193
          %v2258 = vadd.f32 %v2250, %v2195
          %2259 = vst [vmem:[%s263] sm:$0xff] %v2251
          %2260 = vst [vmem:[%s263 + $0x8] sm:$0xff] %v2252
          %2261 = vst [vmem:[%s263 + $0x10] sm:$0xff] %v2253
          %2262 = vst [vmem:[%s263 + $0x18] sm:$0xff] %v2254
          %2263 = vst [vmem:[%s263 + $0x20] sm:$0xff] %v2255
          %2264 = vst [vmem:[%s263 + $0x28] sm:$0xff] %v2256
          %2265 = vst [vmem:[%s263 + $0x30] sm:$0xff] %v2257
          %2266 = vst [vmem:[%s263 + $0x38] sm:$0xff] %v2258
        $region52: #{tpu_custom_call.1} parent=31 // pred_fallthru
          _
        %s2267 = sand.u32 %s121, 1
        %s2268 = scalar_lea.sflag [#allocation4], %s2267
        %s2269 = sand.u32 %s121, 1
        %s2270 = smul.addr %s2269, 64
        %s2271 = scalar_lea.vmem [#allocation8], %s2270
        // Predicated region
        $region53: #{tpu_custom_call.1} parent=31 // pred_check
          %p2272 = pneg %p131
        $region54: #{tpu_custom_call.1} parent=31 // pred_check_branch
          %2274 = sbr.rel (%p2272) target = $region56
        $region55: #{tpu_custom_call.1} parent=31 // pred_region
          %s2275 = smul.u32 4, %s25
          %s2277 = ssub.s32 1024, 1024
          %2278 = vsyncadd %s2268, %s2277
          %s2279 = smul.addr %s2275, 128
          %s2280 = scalar_lea.hbm %s3, %s2279
          %s2281 = sshll.u32 %s2271, 4
          %s2282 = int_to_ptr.vmem [resolvable:$true] %s2281
          %2287 = dma.vmem_to_hbm [thread:$0]  %s2282, 1024, %s2280, %s2268, 512, 1024, 32
        $region56: #{tpu_custom_call.1} parent=31 // pred_fallthru
          _
      $region32: #{tpu_custom_call.1} parent=5 // pred_fallthru
        _
      %p2288 = scmp.le.s32.totalorder 2, %s16
      // Predicated region
      $region57: #{tpu_custom_call.1} parent=5 // pred_check
        %p2289 = pneg %p2288
      $region58: #{tpu_custom_call.1} parent=5 // pred_check_branch
        %2291 = sbr.rel (%p2289) target = $region60
      $region59: #{tpu_custom_call.1} parent=5 // pred_region
        %s2292 = ssub.s32 %s16, 2
        // Predicated region
        $region61: #{tpu_custom_call.1} parent=59 // pred_check
          %p2293 = pneg %p137
        $region62: #{tpu_custom_call.1} parent=59 // pred_check_branch
          %2295 = sbr.rel (%p2293) target = $region64
        $region63: #{tpu_custom_call.1} parent=59 // pred_region
          %s2296 = sand.u32 %s122, 1
          %s2297 = scalar_lea.sflag [#allocation4], %s2296
          %s2298 = sand.u32 %s122, 1
          %s2299 = smul.addr %s2298, 64
          %s2300 = scalar_lea.vmem [#allocation8], %s2299
          %2301 = dma.done %s2297, 1024
        $region64: #{tpu_custom_call.1} parent=59 // pred_fallthru
          _
      $region60: #{tpu_custom_call.1} parent=5 // pred_fallthru
        _
    $region6: #{tpu_custom_call.1} parent=1 // loop_footer
      %s20 = sadd.s32 1, %s16
    $region7: #{tpu_custom_call.1} parent=1 // loop_footer_branch
      %15 = sbr.rel target = $region3
    $region8: #{tpu_custom_call.1} parent=1 // loop_exit
      _
    %2302 = vsyncpa [#allocation3], 1
    %s2303 = scalar_lea.sflag [#allocation3], 1
    %2304 = vsyncpa %s2303, 1
    %2305 = vsyncpa [#allocation6], 1
    %s2306 = scalar_lea.sflag [#allocation6], 1
    %2307 = vsyncpa %s2306, 1
    %2308 = vsyncpa [#allocation4], 1
    %s2309 = scalar_lea.sflag [#allocation4], 1
    %2310 = vsyncpa %s2309, 1

</llo_original>
